<compile_context>
chip_gen: v5e
topology: v5e:2x2
jax: 0.10.0
libtpu: 0.0.40
codegen_flags: <defaults>
</compile_context>

<pallas_src>
import functools
import math

import jax
import jax.numpy as jnp
from jax.experimental import pallas as pl
from jax.experimental.pallas import tpu as pltpu


def _round_up(n, m):
    return ((n + m - 1) // m) * m


def _pad2d(a, rows, cols, dtype):
    out = jnp.zeros((rows, cols), dtype)
    return out.at[: a.shape[0], : a.shape[1]].set(a.astype(dtype))


def _vmem_budget_bytes():
    """~75% of physical VMEM; conservative 64 MiB fallback (v7x has 64 MiB/TC)."""
    cap = 64 * 1024 * 1024
    try:
        cap = int(getattr(pltpu.get_tpu_info(), "vmem_capacity_bytes", cap))
    except Exception:
        pass
    return int(cap * 3 // 4)


def _select_row_tile(n, nhid_p, ncls_p, budget):
    """Largest row tile whose VMEM working set fits the budget.

    First candidate is the fully padded node count: if the whole adjacency fits
    (small graphs), the adj index_map becomes constant and adj is streamed from
    HBM only once for both passes.  Otherwise prefer 1024/512 (v5e/v6e advice)
    and shrink to 256/128 for tighter VMEM (v7x).
    """
    n128 = _round_up(n, 128)
    cands = []
    for c in (n128, 1024, 512, 256, 128):
        if c <= n128 and c not in cands:
            cands.append(c)
    for tm in cands:
        n_pad = _round_up(n, tm)
        need = (2 * tm * n_pad * 2                       # adj tiles, bf16, double-buffered
                + 2 * n_pad * nhid_p * 2                 # support1 (resident, double-buffered)
                + n_pad * ncls_p * 2                     # support2 scratch
                + 2 * tm * ncls_p * 4                    # output tiles, f32, double-buffered
                + 2 * (nhid_p * ncls_p * 2 + ncls_p * 4)  # W2^T + b2
                + (2 << 20))                             # compiler scratch slack
        if need <= budget:
            return tm, n_pad
    # TODO(synk): for graphs too large even for 128-row tiles, add a contraction
    # grid axis so adj blocks become (tm, tk) and VMEM stops scaling with N.
    return 128, _round_up(n, 128)


def _gcn_fused_kernel(s1_ref, adj_ref, w2t_ref, b2_ref, o_ref, s2_ref,
                      *, apply_act, negative_slope):
    """grid = (2 passes, row tiles).

    pass 0, tile i:  s2[rows i] = LeakyReLU(adj[rows i, :] @ s1) @ W2^T + b2
                     (h is never materialised; s2 lives in VMEM scratch)
    pass 1, tile i:  out[rows i] = adj[rows i, :] @ s2
    """
    p = pl.program_id(0)           # 0: build support2, 1: emit output
    i = pl.program_id(1)           # row-tile index
    tm = o_ref.shape[0]
    row0 = pl.multiple_of(i * tm, tm)

    @pl.when(p == 0)
    def _():
        # NOTE: RHS width is only 128 lanes (nhid_p/ncls_p); fine while the
        # kernel is adj-HBM-bandwidth bound.
        h = jnp.dot(adj_ref[...], s1_ref[...], preferred_element_type=jnp.float32)
        if apply_act:
            h = jnp.where(h >= 0, h, negative_slope * h)
        s2 = jnp.dot(h.astype(jnp.bfloat16), w2t_ref[...],
                     preferred_element_type=jnp.float32) + b2_ref[...]
        s2_ref[pl.ds(row0, tm), :] = s2.astype(s2_ref.dtype)
        # The output block (index (i, 0)) is revisited in pass 1; store the s2
        # tile now so every write-back carries defined data (pass 1 overwrites
        # it with the final rows).  No uninitialized VMEM ever reaches HBM.
        o_ref[...] = s2.astype(o_ref.dtype)

    @pl.when(p == 1)
    def _():
        out = jnp.dot(adj_ref[...], s2_ref[...], preferred_element_type=jnp.float32)
        o_ref[...] = out.astype(o_ref.dtype)


def prepare_gcn_params(params):
    """Pad + transpose torch-layout weights ONCE (outside the per-call path).

    params["w*"] follow nn.Linear layout [out_features, in_features].  Returns
    bf16 [in_pad, out_pad] transposed weights and f32 (1, out_pad) biases with
    every feature dimension zero-padded to a multiple of 128 lanes.
    """
    w1, b1, w2, b2 = params["w1"], params["b1"], params["w2"], params["b2"]
    nhid, nfeat = w1.shape
    nclass = w2.shape[0]
    nfeat_p = _round_up(nfeat, 128)
    nhid_p = _round_up(nhid, 128)
    ncls_p = _round_up(nclass, 128)
    return {
        "w1t": _pad2d(w1.T, nfeat_p, nhid_p, jnp.bfloat16),
        "b1": _pad2d(b1.reshape(1, -1), 1, nhid_p, jnp.float32),
        "w2t": _pad2d(w2.T, nhid_p, ncls_p, jnp.bfloat16),
        "b2": _pad2d(b2.reshape(1, -1), 1, ncls_p, jnp.float32),
        "nfeat": nfeat, "nhid": nhid, "nclass": nclass,
    }


def prepare_adj(adj, prepared, row_tile=None):
    """Pad + bf16-cast the adjacency ONCE (it is static across forward calls)
    and pick the row tiling for the current chip's VMEM budget."""
    n = adj.shape[0]
    assert adj.shape == (n, n)
    nhid_p = _round_up(prepared["nhid"], 128)
    ncls_p = _round_up(prepared["nclass"], 128)
    if row_tile is None:
        tm, n_pad = _select_row_tile(n, nhid_p, ncls_p, _vmem_budget_bytes())
    else:
        tm = _round_up(row_tile, 128)
        n_pad = _round_up(n, tm)
    # Padded rows AND columns of adj are zero; the zero columns are what
    # annihilate the bias-valued padded rows of support1/support2 below.
    return {"adj_p": _pad2d(adj, n_pad, n_pad, jnp.bfloat16), "n": n, "tm": tm}


@functools.partial(jax.jit, static_argnames=("tm", "nclass", "use_relu"))
def _gcn_forward_jit(x, adj_p, w1t, b1, w2t, b2, *, tm, nclass, use_relu):
    n, nfeat = x.shape
    n_pad = adj_p.shape[0]
    nfeat_p, nhid_p = w1t.shape
    ncls_p = w2t.shape[1]
    num_tiles = n_pad // tm

    # Layer-1 projection OUTSIDE the kernel (plain XLA matmul): keeps the big,
    # double-buffered x block out of kernel VMEM and avoids the serializing
    # first-step matmul.  s1's HBM roundtrip is N*nhid_p*2 B (<5% of one adj pass).
    x_p = jnp.zeros((n_pad, nfeat_p), jnp.bfloat16).at[:n, :nfeat].set(
        x.astype(jnp.bfloat16))
    s1 = (jnp.dot(x_p, w1t, preferred_element_type=jnp.float32) + b1
          ).astype(jnp.bfloat16)
    # NOTE: padded rows of s1 equal b1 (not zero); they are annihilated only
    # because the padded *columns* of adj_p are zero.  Same for s2 and b2.

    flops = (2 * n_pad * n_pad * nhid_p        # adj @ s1
             + 2 * n_pad * nhid_p * ncls_p     # h @ W2^T
             + 2 * n_pad * n_pad * ncls_p)     # adj @ s2
    adj_streams = 1 if num_tiles == 1 else 2   # resident fast path streams adj once
    bytes_accessed = (adj_streams * n_pad * n_pad * 2
                      + n_pad * nhid_p * 2
                      + nhid_p * ncls_p * 2 + ncls_p * 4
                      + n_pad * ncls_p * 4)

    kernel = functools.partial(_gcn_fused_kernel, apply_act=bool(use_relu),
                               negative_slope=0.01)

    out_p = pl.pallas_call(
        kernel,
        out_shape=jax.ShapeDtypeStruct((n_pad, ncls_p), jnp.float32),
        grid_spec=pltpu.PrefetchScalarGridSpec(
            num_scalar_prefetch=0,
            grid=(2, num_tiles),                                      # (pass, row tile)
            in_specs=[
                # support1 must be fully resident: every adj row tile contracts
                # over all of its rows.
                pl.BlockSpec((n_pad, nhid_p), lambda p, i: (0, 0)),
                # adj row tile; index is constant when num_tiles == 1 (small-graph
                # fast path: adjacency DMA'd from HBM once for BOTH passes).
                pl.BlockSpec((tm, n_pad), lambda p, i: (i, 0)),
                pl.BlockSpec((nhid_p, ncls_p), lambda p, i: (0, 0)),  # W2^T (resident)
                pl.BlockSpec((1, ncls_p), lambda p, i: (0, 0)),       # b2
            ],
            # Output block follows the row tile in both passes; the kernel fully
            # writes it at every visit, so revisits are benign.
            out_specs=pl.BlockSpec((tm, ncls_p), lambda p, i: (i, 0)),
            scratch_shapes=[pltpu.VMEM((n_pad, ncls_p), jnp.bfloat16)],  # support2
        ),
        compiler_params=pltpu.CompilerParams(
            # support2 scratch carries state from pass 0 into pass 1, so neither
            # grid axis may be megacore-sharded in the fused form.
            dimension_semantics=("arbitrary", "arbitrary"),
            vmem_limit_bytes=_vmem_budget_bytes(),
        ),
        cost_estimate=pl.CostEstimate(flops=flops, transcendentals=0,
                                      bytes_accessed=bytes_accessed),
    )(s1, adj_p, w2t, b2)

    return out_p[:n, :nclass]


def gcn_forward(x, adj_prep, prepared, use_relu=True):
    """Fused two-layer GCN forward (eval mode)."""
    assert x.shape[0] == adj_prep["n"]
    assert x.shape[1] == prepared["nfeat"]
    return _gcn_forward_jit(
        x, adj_prep["adj_p"], prepared["w1t"], prepared["b1"],
        prepared["w2t"], prepared["b2"],
        tm=int(adj_prep["tm"]), nclass=int(prepared["nclass"]),
        use_relu=bool(use_relu))


def init_gcn_params(key, nfeat, nhid, nclass):
    """Deterministic init mirroring GraphConvolution.init_param (uniform +-1/sqrt(fan_in))."""
    k1, k2, k3, k4 = jax.random.split(key, 4)
    s1 = 1.0 / math.sqrt(nfeat)
    s2 = 1.0 / math.sqrt(nhid)
    return {
        "w1": jax.random.uniform(k1, (nhid, nfeat), jnp.float32, -s1, s1),
        "b1": jax.random.uniform(k2, (nhid,), jnp.float32, -s1, s1),
        "w2": jax.random.uniform(k3, (nclass, nhid), jnp.float32, -s2, s2),
        "b2": jax.random.uniform(k4, (nclass,), jnp.float32, -s2, s2),
    }


def _reference_forward(x, adj, params, use_relu=True):
    h = adj @ (x @ params["w1"].T + params["b1"])
    if use_relu:
        h = jnp.where(h >= 0, h, 0.01 * h)
    return adj @ (h @ params["w2"].T + params["b2"])


if __name__ == "__main__":
    key = jax.random.PRNGKey(0)
    kx, kadj, kp = jax.random.split(key, 3)

    N, nfeat, nhid, nclass = 300, 48, 64, 10

    x = jax.random.normal(kx, (N, nfeat), jnp.float32)
    # symmetric row-normalized dense adjacency
    a = jax.random.uniform(kadj, (N, N), jnp.float32)
    adj = (a + a.T) * 0.5
    adj = adj / jnp.sum(adj, axis=-1, keepdims=True)

    params = init_gcn_params(kp, nfeat, nhid, nclass)
    prepared = prepare_gcn_params(params)            # pad/transpose weights once
    ref = _reference_forward(x, adj, params, use_relu=True)

    # 1) auto tiling: the whole (384, 384) padded adjacency fits VMEM ->
    #    resident fast path, grid (2, 1), adj streamed once.
    adj_auto = prepare_adj(adj, prepared)
    out_auto = jax.block_until_ready(gcn_forward(x, adj_auto, prepared, use_relu=True))

    # 2) forced 128-row tiles -> streamed-adj path, grid (2, 3), exercises the
    #    dynamic s2 scratch writes and revisited output blocks.
    adj_tiled = prepare_adj(adj, prepared, row_tile=128)
    out_tiled = jax.block_until_ready(gcn_forward(x, adj_tiled, prepared, use_relu=True))

    for out in (out_auto, out_tiled):
        assert out.shape == (N, nclass)
        max_err = float(jnp.max(jnp.abs(out - ref)))
        # bf16 operands + f32 accumulation: quantization-level tolerance vs f32 ref.
        assert jnp.allclose(out, ref, atol=3e-2, rtol=3e-2), f"max abs err {max_err}"

    print("KERNEL_OK")
</pallas_src>

<mosaic_0001>
module attributes {stable_mosaic.version = 11 : i64} {
  func.func @_gcn_fused_kernel(%arg0: i32, %arg1: i32, %arg2: memref<384x128xbf16, #tpu.memory_space<vmem>>, %arg3: memref<384x384xbf16, #tpu.memory_space<vmem>>, %arg4: memref<128x128xbf16, #tpu.memory_space<vmem>>, %arg5: memref<1x128xf32, #tpu.memory_space<vmem>>, %arg6: memref<384x128xf32, #tpu.memory_space<vmem>>, %arg7: memref<384x128xbf16, #tpu.memory_space<vmem>>) attributes {dimension_semantics = [#tpu.dimension_semantics<arbitrary>, #tpu.dimension_semantics<arbitrary>], iteration_bounds = array<i64: 2, 1>, scalar_prefetch = 0 : i64, scratch_operands = 1 : i64, tpu.core_type = #tpu.core_type<tc>, window_params = [{pipeline_mode = #tpu.pipeline_mode<synchronous>, transform_indices = @transform_0, window_bounds = array<i64: 384, 128>}, {transform_indices = @transform_1, window_bounds = array<i64: 384, 384>}, {pipeline_mode = #tpu.pipeline_mode<synchronous>, transform_indices = @transform_2, window_bounds = array<i64: 128, 128>}, {pipeline_mode = #tpu.pipeline_mode<synchronous>, transform_indices = @transform_3, window_bounds = array<i64: 1, 128>}, {transform_indices = @transform_4, window_bounds = array<i64: 384, 128>}]} {
    %c384_i32 = arith.constant 384 : i32
    %0 = arith.muli %arg1, %c384_i32 : i32
    %1 = tpu.assume_multiple %0, 384 : i32
    %c0_i32 = arith.constant 0 : i32
    %2 = arith.cmpi eq, %arg0, %c0_i32 : i32
    %3 = arith.extui %2 : i1 to i32
    %c0_i32_0 = arith.constant 0 : i32
    %4 = arith.cmpi ne, %3, %c0_i32_0 : i32
    scf.if %4 {
      %c0 = arith.constant 0 : index
      %c0_2 = arith.constant 0 : index
      %8 = vector.load %arg3[%c0, %c0_2] : memref<384x384xbf16, #tpu.memory_space<vmem>>, vector<384x384xbf16>
      %c0_3 = arith.constant 0 : index
      %c0_4 = arith.constant 0 : index
      %9 = vector.load %arg2[%c0_3, %c0_4] : memref<384x128xbf16, #tpu.memory_space<vmem>>, vector<384x128xbf16>
      %cst = arith.constant dense<0.000000e+00> : vector<384x128xf32>
      %10 = tpu.matmul %8, %9, %cst {dimension_numbers = #tpu.dot_dimension_numbers<[1], [0], [0], [1], [0, 0, 1, 1], [], []>} : vector<384x384xbf16>, vector<384x128xbf16>, vector<384x128xf32> -> vector<384x128xf32>
      %cst_5 = arith.constant 0.000000e+00 : f32
      %11 = vector.broadcast %cst_5 : f32 to vector<384x128xf32>
      %12 = arith.cmpf oge, %10, %11 : vector<384x128xf32>
      %cst_6 = arith.constant 0.00999999977 : f32
      %13 = vector.broadcast %cst_6 : f32 to vector<384x128xf32>
      %14 = arith.mulf %13, %10 : vector<384x128xf32>
      %15 = arith.select %12, %10, %14 : vector<384x128xi1>, vector<384x128xf32>
      %16 = arith.truncf %15 : vector<384x128xf32> to vector<384x128xbf16>
      %c0_7 = arith.constant 0 : index
      %c0_8 = arith.constant 0 : index
      %17 = vector.load %arg4[%c0_7, %c0_8] : memref<128x128xbf16, #tpu.memory_space<vmem>>, vector<128x128xbf16>
      %cst_9 = arith.constant dense<0.000000e+00> : vector<384x128xf32>
      %18 = tpu.matmul %16, %17, %cst_9 {dimension_numbers = #tpu.dot_dimension_numbers<[1], [0], [0], [1], [0, 0, 1, 1], [], []>} : vector<384x128xbf16>, vector<128x128xbf16>, vector<384x128xf32> -> vector<384x128xf32>
      %c0_10 = arith.constant 0 : index
      %c0_11 = arith.constant 0 : index
      %19 = vector.load %arg5[%c0_10, %c0_11] : memref<1x128xf32, #tpu.memory_space<vmem>>, vector<1x128xf32>
      %20 = vector.broadcast %19 : vector<1x128xf32> to vector<384x128xf32>
      %21 = arith.addf %18, %20 : vector<384x128xf32>
      %22 = arith.truncf %21 : vector<384x128xf32> to vector<384x128xbf16>
      %23 = arith.index_cast %1 : i32 to index
      %c0_12 = arith.constant 0 : index
      %24 = vector.load %arg7[%23, %c0_12] : memref<384x128xbf16, #tpu.memory_space<vmem>>, vector<384x128xbf16>
      tpu.vector_store %arg7[%23, %c0_12], %22 {strides = array<i32>} : memref<384x128xbf16, #tpu.memory_space<vmem>>, vector<384x128xbf16>,
      %c0_13 = arith.constant 0 : index
      %c0_14 = arith.constant 0 : index
      %25 = vector.load %arg6[%c0_13, %c0_14] : memref<384x128xf32, #tpu.memory_space<vmem>>, vector<384x128xf32>
      tpu.vector_store %arg6[%c0_13, %c0_14], %21 {strides = array<i32>} : memref<384x128xf32, #tpu.memory_space<vmem>>, vector<384x128xf32>,
    } else {
    }
    %c1_i32 = arith.constant 1 : i32
    %5 = arith.cmpi eq, %arg0, %c1_i32 : i32
    %6 = arith.extui %5 : i1 to i32
    %c0_i32_1 = arith.constant 0 : i32
    %7 = arith.cmpi ne, %6, %c0_i32_1 : i32
    scf.if %7 {
      %c0 = arith.constant 0 : index
      %c0_2 = arith.constant 0 : index
      %8 = vector.load %arg3[%c0, %c0_2] : memref<384x384xbf16, #tpu.memory_space<vmem>>, vector<384x384xbf16>
      %c0_3 = arith.constant 0 : index
      %c0_4 = arith.constant 0 : index
      %9 = vector.load %arg7[%c0_3, %c0_4] : memref<384x128xbf16, #tpu.memory_space<vmem>>, vector<384x128xbf16>
      %cst = arith.constant dense<0.000000e+00> : vector<384x128xf32>
      %10 = tpu.matmul %8, %9, %cst {dimension_numbers = #tpu.dot_dimension_numbers<[1], [0], [0], [1], [0, 0, 1, 1], [], []>} : vector<384x384xbf16>, vector<384x128xbf16>, vector<384x128xf32> -> vector<384x128xf32>
      %c0_5 = arith.constant 0 : index
      %c0_6 = arith.constant 0 : index
      %11 = vector.load %arg6[%c0_5, %c0_6] : memref<384x128xf32, #tpu.memory_space<vmem>>, vector<384x128xf32>
      tpu.vector_store %arg6[%c0_5, %c0_6], %10 {strides = array<i32>} : memref<384x128xf32, #tpu.memory_space<vmem>>, vector<384x128xf32>,
    } else {
    }
    return
  }
  func.func @transform_0(%arg0: i32, %arg1: i32) -> (i32, i32) {
    %c0_i32 = arith.constant 0 : i32
    %c0_i32_0 = arith.constant 0 : i32
    %c0_i32_1 = arith.constant 0 : i32
    return %c0_i32, %c0_i32_0 : i32, i32
  }
  func.func @transform_1(%arg0: i32, %arg1: i32) -> (i32, i32) {
    %c0_i32 = arith.constant 0 : i32
    %c0_i32_0 = arith.constant 0 : i32
    return %arg1, %c0_i32 : i32, i32
  }
  func.func @transform_2(%arg0: i32, %arg1: i32) -> (i32, i32) {
    %c0_i32 = arith.constant 0 : i32
    %c0_i32_0 = arith.constant 0 : i32
    %c0_i32_1 = arith.constant 0 : i32
    return %c0_i32, %c0_i32_0 : i32, i32
  }
  func.func @transform_3(%arg0: i32, %arg1: i32) -> (i32, i32) {
    %c0_i32 = arith.constant 0 : i32
    %c0_i32_0 = arith.constant 0 : i32
    %c0_i32_1 = arith.constant 0 : i32
    return %c0_i32, %c0_i32_0 : i32, i32
  }
  func.func @transform_4(%arg0: i32, %arg1: i32) -> (i32, i32) {
    %c0_i32 = arith.constant 0 : i32
    %c0_i32_0 = arith.constant 0 : i32
    return %arg1, %c0_i32 : i32, i32
  }
}

</mosaic_0001>

<llo_original>
// kernel: _gcn_forward_jit.1
$region0: #{_gcn_forward_jit.1}
  #allocation0 [shape = 'u32[]', space=smem, size = 0x4, offset = 0x4, fixed_abs, tag = 'smem constant byte address 0x4 - core index']
  #allocation1 [shape = 'u32[72,128]{1,0:T(1,128)}', space=vmem, size = 0x9000, scoped, tag = 'internal scratch']
  #allocation2 [shape = 'bf16[384,128]{1,0:T(8,128)(2,1)}', space=vmem, size = 0x18000, scoped, tag = 'scratch operand']
  %s0 = inlined_call_operand.vmem [shape: bf16[384,128], index: 0, kind: input, shape index: {}]
  %s1 = inlined_call_operand.hbm [shape: bf16[384,384], index: 1, kind: input, shape index: {}]
  %s2 = inlined_call_operand.vmem [shape: bf16[128,128], index: 2, kind: input, shape index: {}]
  %s3 = inlined_call_operand.vmem [shape: f32[1,128], index: 3, kind: input, shape index: {}]
  %s4 = inlined_call_operand.vmem [shape: f32[384,128], index: 4, kind: output, shape index: {}]
  %s5 = sld [smem:[#allocation0]]
  $region61: #{_gcn_forward_jit.1} parent=0
    _
  %s7 = ssub.s32 1, %s5
  %s8 = scalar_select 0, %s7, %s5
  $region1: #{_gcn_forward_jit.1} parent=0
    #allocation3 [shape = 'u8[294912]{0}', space=vmem, size = 0x48000, scoped, tag = 'input window, operand 1, single buffered']
    #allocation4 [shape = 's32[2]{0}', space=sflag, size = 0x8, scoped, tag = 'scoped memory for _gcn_forward_jit.1']
    %9 = vsyncpa [#allocation4], 0
    loop: start=0, step=1, limit=4
    $region2: #{_gcn_forward_jit.1} parent=1 // loop_pre_header
      _
    $region3: #{_gcn_forward_jit.1} parent=1 // loop_header
      %s11 = sphi 0, %s15
      %p12 = scmp.ge.s32.totalorder %s11, 4
      %s18 = sphi 0, %s30
      %s19 = sphi 0, %s26
      %s20 = sphi 0, %s18
      %s21 = sphi 0, %s19
      %s22 = sphi 0, %s20
      %s23 = sphi 0, %s21
      %s31 = sphi 0, %s31
      %s33 = sphi 0, %s31
      %s34 = sphi 0, %s33
      %s48 = sphi 0, %s34
      %s54 = sphi 0, %s56
      %s57 = sphi 0, %s54
      %s58 = sphi 0, %s57
      %s74 = sphi 0, %s58
      %s78 = sphi 0, %s78
      %s80 = sphi 0, %s78
      %s81 = sphi 0, %s80
      %s95 = sphi 0, %s81
      %s99 = sphi 0, %s99
      %s101 = sphi 0, %s99
      %s102 = sphi 0, %s101
      %s116 = sphi 0, %s102
      %s122 = sphi 0, %s124
      %s125 = sphi 0, %s122
      %s126 = sphi 0, %s125
      %s142 = sphi 0, %s126
    $region4: #{_gcn_forward_jit.1} parent=1 // loop_header_branch
      %14 = sbr.rel (%p12) target = $region8
    $region5: #{_gcn_forward_jit.1} parent=1 // loop_body
      %s16 = ssub.s32 %s11, 1
      %s17 = ssub.s32 %s11, 2
      %s24 = sadd.s32 1, %s19
      %p25 = scmp.ge.s32.totalorder %s24, 1
      %s26 = scalar_select %p25, 0, %s24
      %s27 = sadd.s32 1, %s18
      %s28 = scalar_select %p25, %s27, %s18
      %p29 = scmp.ge.s32.totalorder %s28, 2
      %s30 = scalar_select %p29, 0, %s28
      %s32 = sadd.s32 %s31, 1
      %p35 = scmp.eq.s32.totalorder %s11, 1
      %p36 = scmp.ne.s32.totalorder %s31, %s33
      %p37 = scmp.eq.s32.totalorder %s11, 0
      %p38 = por %p36, %p37
      %p39 = scmp.ne.s32.totalorder %s31, %s33
      %p40 = scmp.eq.s32.totalorder %s16, 1
      %p41 = por %p39, %p40
      %p42 = scmp.ne.s32.totalorder %s33, %s34
      %p43 = scmp.eq.s32.totalorder %s16, 0
      %p44 = por %p42, %p43
      %p45 = scmp.ne.s32.totalorder %s33, %s34
      %p46 = scmp.eq.s32.totalorder %s17, 1
      %p47 = por %p45, %p46
      %p49 = scmp.ne.s32.totalorder %s34, %s48
      %p50 = scmp.eq.s32.totalorder %s17, 0
      %p51 = por %p49, %p50
      %s52 = ssub.s32 %s19, %s26
      %p53 = scmp.eq.s32.totalorder %s52, 0
      %s55 = sadd.s32 %s54, 1
      %s56 = scalar_select %p53, %s54, %s55
      %p59 = pneg %p53
      %p60 = scmp.eq.s32.totalorder %s11, 1
      %p61 = por %p59, %p60
      %p62 = scmp.ne.s32.totalorder %s54, %s57
      %p63 = scmp.eq.s32.totalorder %s11, 0
      %p64 = por %p62, %p63
      %p65 = scmp.ne.s32.totalorder %s54, %s57
      %p66 = scmp.eq.s32.totalorder %s16, 1
      %p67 = por %p65, %p66
      %p68 = scmp.ne.s32.totalorder %s57, %s58
      %p69 = scmp.eq.s32.totalorder %s16, 0
      %p70 = por %p68, %p69
      %p71 = scmp.ne.s32.totalorder %s57, %s58
      %p72 = scmp.eq.s32.totalorder %s17, 1
      %p73 = por %p71, %p72
      %p75 = scmp.ne.s32.totalorder %s58, %s74
      %p76 = scmp.eq.s32.totalorder %s17, 0
      %p77 = por %p75, %p76
      %s79 = sadd.s32 %s78, 1
      %p82 = scmp.eq.s32.totalorder %s11, 1
      %p83 = scmp.ne.s32.totalorder %s78, %s80
      %p84 = scmp.eq.s32.totalorder %s11, 0
      %p85 = por %p83, %p84
      %p86 = scmp.ne.s32.totalorder %s78, %s80
      %p87 = scmp.eq.s32.totalorder %s16, 1
      %p88 = por %p86, %p87
      %p89 = scmp.ne.s32.totalorder %s80, %s81
      %p90 = scmp.eq.s32.totalorder %s16, 0
      %p91 = por %p89, %p90
      %p92 = scmp.ne.s32.totalorder %s80, %s81
      %p93 = scmp.eq.s32.totalorder %s17, 1
      %p94 = por %p92, %p93
      %p96 = scmp.ne.s32.totalorder %s81, %s95
      %p97 = scmp.eq.s32.totalorder %s17, 0
      %p98 = por %p96, %p97
      %s100 = sadd.s32 %s99, 1
      %p103 = scmp.eq.s32.totalorder %s11, 1
      %p104 = scmp.ne.s32.totalorder %s99, %s101
      %p105 = scmp.eq.s32.totalorder %s11, 0
      %p106 = por %p104, %p105
      %p107 = scmp.ne.s32.totalorder %s99, %s101
      %p108 = scmp.eq.s32.totalorder %s16, 1
      %p109 = por %p107, %p108
      %p110 = scmp.ne.s32.totalorder %s101, %s102
      %p111 = scmp.eq.s32.totalorder %s16, 0
      %p112 = por %p110, %p111
      %p113 = scmp.ne.s32.totalorder %s101, %s102
      %p114 = scmp.eq.s32.totalorder %s17, 1
      %p115 = por %p113, %p114
      %p117 = scmp.ne.s32.totalorder %s102, %s116
      %p118 = scmp.eq.s32.totalorder %s17, 0
      %p119 = por %p117, %p118
      %s120 = ssub.s32 %s19, %s26
      %p121 = scmp.eq.s32.totalorder %s120, 0
      %s123 = sadd.s32 %s122, 1
      %s124 = scalar_select %p121, %s122, %s123
      %p127 = pneg %p121
      %p128 = scmp.eq.s32.totalorder %s11, 1
      %p129 = por %p127, %p128
      %p130 = scmp.ne.s32.totalorder %s122, %s125
      %p131 = scmp.eq.s32.totalorder %s11, 0
      %p132 = por %p130, %p131
      %p133 = scmp.ne.s32.totalorder %s122, %s125
      %p134 = scmp.eq.s32.totalorder %s16, 1
      %p135 = por %p133, %p134
      %p136 = scmp.ne.s32.totalorder %s125, %s126
      %p137 = scmp.eq.s32.totalorder %s16, 0
      %p138 = por %p136, %p137
      %p139 = scmp.ne.s32.totalorder %s125, %s126
      %p140 = scmp.eq.s32.totalorder %s17, 1
      %p141 = por %p139, %p140
      %p143 = scmp.ne.s32.totalorder %s126, %s142
      %p144 = scmp.eq.s32.totalorder %s17, 0
      %p145 = por %p143, %p144
      %p146 = scmp.le.s32.totalorder 1, %s11
      %p147 = scmp.lt.s32.totalorder %s11, 3
      %p148 = pnand %p146, %p147
      %p149 = pneg %p148
      // Predicated region
      $region9: #{_gcn_forward_jit.1} parent=5 // pred_check
        _
      $region10: #{_gcn_forward_jit.1} parent=5 // pred_check_branch
        %151 = sbr.rel (%p148) target = $region12
      $region11: #{_gcn_forward_jit.1} parent=5 // pred_region
        %s152 = ssub.s32 %s11, 1
        // Predicated region
        $region13: #{_gcn_forward_jit.1} parent=11 // pred_check
          %p153 = pneg %p44
        $region14: #{_gcn_forward_jit.1} parent=11 // pred_check_branch
          %155 = sbr.rel (%p153) target = $region16
        $region15: #{_gcn_forward_jit.1} parent=11 // pred_region
          _
        $region16: #{_gcn_forward_jit.1} parent=11 // pred_fallthru
          _
        // Predicated region
        $region17: #{_gcn_forward_jit.1} parent=11 // pred_check
          %p156 = pneg %p70
        $region18: #{_gcn_forward_jit.1} parent=11 // pred_check_branch
          %158 = sbr.rel (%p156) target = $region20
        $region19: #{_gcn_forward_jit.1} parent=11 // pred_region
          %s159 = smul.u32 48, %s21
          %161 = vsyncadd [#allocation4], 0
          %s162 = smul.addr %s159, 3
          %s163 = smul.addr %s162, 4
          %s164 = scalar_lea.hbm %s1, %s163
          %s165 = sshll.u32 %s164, 4
          %s166 = int_to_ptr.hbm [resolvable:$true] %s165
          %s167 = sshll.u32 [#allocation3], 4
          %s168 = int_to_ptr.vmem [resolvable:$true] %s167
          %173 = dma.hbm_to_vmem [thread:$0]  %s166, 9216, %s168, [#allocation4], 192, 192, 12
        $region20: #{_gcn_forward_jit.1} parent=11 // pred_fallthru
          _
        // Predicated region
        $region21: #{_gcn_forward_jit.1} parent=11 // pred_check
          %p174 = pneg %p91
        $region22: #{_gcn_forward_jit.1} parent=11 // pred_check_branch
          %176 = sbr.rel (%p174) target = $region24
        $region23: #{_gcn_forward_jit.1} parent=11 // pred_region
          _
        $region24: #{_gcn_forward_jit.1} parent=11 // pred_fallthru
          _
        // Predicated region
        $region25: #{_gcn_forward_jit.1} parent=11 // pred_check
          %p177 = pneg %p112
        $region26: #{_gcn_forward_jit.1} parent=11 // pred_check_branch
          %179 = sbr.rel (%p177) target = $region28
        $region27: #{_gcn_forward_jit.1} parent=11 // pred_region
          _
        $region28: #{_gcn_forward_jit.1} parent=11 // pred_fallthru
          _
      $region12: #{_gcn_forward_jit.1} parent=5 // pred_fallthru
        _
      %p180 = scmp.lt.s32.totalorder %s11, 2
      // Predicated region
      $region29: #{_gcn_forward_jit.1} parent=5 // pred_check
        %p181 = pneg %p180
      $region30: #{_gcn_forward_jit.1} parent=5 // pred_check_branch
        %183 = sbr.rel (%p181) target = $region32
      $region31: #{_gcn_forward_jit.1} parent=5 // pred_region
        _
      $region32: #{_gcn_forward_jit.1} parent=5 // pred_fallthru
        _
      %p184 = scmp.le.s32.totalorder 1, %s11
      %p185 = scmp.lt.s32.totalorder %s11, 3
      %p186 = pnand %p184, %p185
      %p187 = pneg %p186
      // Predicated region
      $region33: #{_gcn_forward_jit.1} parent=5 // pred_check
        _
      $region34: #{_gcn_forward_jit.1} parent=5 // pred_check_branch
        %189 = sbr.rel (%p186) target = $region36
      $region35: #{_gcn_forward_jit.1} parent=5 // pred_region
        %s190 = ssub.s32 %s11, 1
        // Predicated region
        $region37: #{_gcn_forward_jit.1} parent=35 // pred_check
          %p191 = pneg %p70
        $region38: #{_gcn_forward_jit.1} parent=35 // pred_check_branch
          %193 = sbr.rel (%p191) target = $region40
        $region39: #{_gcn_forward_jit.1} parent=35 // pred_region
          %195 = dma.done [#allocation4], 9216
        $region40: #{_gcn_forward_jit.1} parent=35 // pred_fallthru
          _
        %p196 = pneg %p44
        %p197 = pneg %p41
        %p198 = pneg %p70
        %p199 = pneg %p67
        %p200 = pneg %p91
        %p201 = pneg %p88
        %p202 = pneg %p112
        %p203 = pneg %p109
        %p204 = pneg %p138
        %p205 = pneg %p135
        %s206 = smul.u32 48, %s21
        %p207 = scmp.lt.s32.totalorder %s206, 47
        %s208 = scalar_select %p207, %s206, 47
        %s209 = smul.addr %s208, 8
        %s210 = scalar_lea.vmem %s4, %s209
        %s211 = smul.u32 48, %s21
        %s212 = smul.u32 48, %s21
        %p213 = scmp.lt.s32.totalorder %s212, 47
        %s214 = scalar_select %p213, %s212, 47
        %s215 = smul.addr %s214, 8
        %s216 = scalar_lea.vmem %s4, %s215
        %s217 = smul.u32 48, %s21
        %s218 = smul.u32 %s21, 384
        %p219 = scmp.eq.s32.totalorder %s20, 0
        // Predicated region
        $region41: #{_gcn_forward_jit.1} parent=35 // pred_check
          %p220 = pneg %p219
        $region42: #{_gcn_forward_jit.1} parent=35 // pred_check_branch
          %222 = sbr.rel (%p220) target = $region44
        $region43: #{_gcn_forward_jit.1} parent=35 // pred_region
          %v223 = vld [vmem:[#allocation3] sm:$0xff]
          %v224 = vld [vmem:[#allocation3 + $0x8] sm:$0xf]
          %v225 = vld [vmem:[#allocation3 + $0xc] sm:$0xff]
          %v226 = vld [vmem:[#allocation3 + $0x14] sm:$0xf]
          %v227 = vld [vmem:[#allocation3 + $0x18] sm:$0xff]
          %v228 = vld [vmem:[#allocation3 + $0x20] sm:$0xf]
          %v229 = vld [vmem:[#allocation3 + $0x24] sm:$0xff]
          %v230 = vld [vmem:[#allocation3 + $0x2c] sm:$0xf]
          %v231 = vld [vmem:[#allocation3 + $0x30] sm:$0xff]
          %v232 = vld [vmem:[#allocation3 + $0x38] sm:$0xf]
          %v233 = vld [vmem:[#allocation3 + $0x3c] sm:$0xff]
          %v234 = vld [vmem:[#allocation3 + $0x44] sm:$0xf]
          %v235 = vld [vmem:[#allocation3 + $0x48] sm:$0xff]
          %v236 = vld [vmem:[#allocation3 + $0x50] sm:$0xf]
          %v237 = vld [vmem:[#allocation3 + $0x54] sm:$0xff]
          %v238 = vld [vmem:[#allocation3 + $0x5c] sm:$0xf]
          %v239 = vld [vmem:[#allocation3 + $0x60] sm:$0xff]
          %v240 = vld [vmem:[#allocation3 + $0x68] sm:$0xf]
          %v241 = vld [vmem:[#allocation3 + $0x6c] sm:$0xff]
          %v242 = vld [vmem:[#allocation3 + $0x74] sm:$0xf]
          %v243 = vld [vmem:[#allocation3 + $0x78] sm:$0xff]
          %v244 = vld [vmem:[#allocation3 + $0x80] sm:$0xf]
          %v245 = vld [vmem:[#allocation3 + $0x84] sm:$0xff]
          %v246 = vld [vmem:[#allocation3 + $0x8c] sm:$0xf]
          %v247 = vld [vmem:[#allocation3 + $0x90] sm:$0xff]
          %v248 = vld [vmem:[#allocation3 + $0x98] sm:$0xf]
          %v249 = vld [vmem:[#allocation3 + $0x9c] sm:$0xff]
          %v250 = vld [vmem:[#allocation3 + $0xa4] sm:$0xf]
          %v251 = vld [vmem:[#allocation3 + $0xa8] sm:$0xff]
          %v252 = vld [vmem:[#allocation3 + $0xb0] sm:$0xf]
          %v253 = vld [vmem:[#allocation3 + $0xb4] sm:$0xff]
          %v254 = vld [vmem:[#allocation3 + $0xbc] sm:$0xf]
          %v255 = vld [vmem:[#allocation3 + $0xc0] sm:$0xff]
          %v256 = vld [vmem:[#allocation3 + $0xc8] sm:$0xf]
          %v257 = vld [vmem:[#allocation3 + $0xcc] sm:$0xff]
          %v258 = vld [vmem:[#allocation3 + $0xd4] sm:$0xf]
          %v259 = vld [vmem:[#allocation3 + $0xd8] sm:$0xff]
          %v260 = vld [vmem:[#allocation3 + $0xe0] sm:$0xf]
          %v261 = vld [vmem:[#allocation3 + $0xe4] sm:$0xff]
          %v262 = vld [vmem:[#allocation3 + $0xec] sm:$0xf]
          %v263 = vld [vmem:[#allocation3 + $0xf0] sm:$0xff]
          %v264 = vld [vmem:[#allocation3 + $0xf8] sm:$0xf]
          %v265 = vld [vmem:[#allocation3 + $0xfc] sm:$0xff]
          %v266 = vld [vmem:[#allocation3 + $0x104] sm:$0xf]
          %v267 = vld [vmem:[#allocation3 + $0x108] sm:$0xff]
          %v268 = vld [vmem:[#allocation3 + $0x110] sm:$0xf]
          %v269 = vld [vmem:[#allocation3 + $0x114] sm:$0xff]
          %v270 = vld [vmem:[#allocation3 + $0x11c] sm:$0xf]
          %v271 = vld [vmem:[#allocation3 + $0x120] sm:$0xff]
          %v272 = vld [vmem:[#allocation3 + $0x128] sm:$0xf]
          %v273 = vld [vmem:[#allocation3 + $0x12c] sm:$0xff]
          %v274 = vld [vmem:[#allocation3 + $0x134] sm:$0xf]
          %v275 = vld [vmem:[#allocation3 + $0x138] sm:$0xff]
          %v276 = vld [vmem:[#allocation3 + $0x140] sm:$0xf]
          %v277 = vld [vmem:[#allocation3 + $0x144] sm:$0xff]
          %v278 = vld [vmem:[#allocation3 + $0x14c] sm:$0xf]
          %v279 = vld [vmem:[#allocation3 + $0x150] sm:$0xff]
          %v280 = vld [vmem:[#allocation3 + $0x158] sm:$0xf]
          %v281 = vld [vmem:[#allocation3 + $0x15c] sm:$0xff]
          %v282 = vld [vmem:[#allocation3 + $0x164] sm:$0xf]
          %v283 = vld [vmem:[#allocation3 + $0x168] sm:$0xff]
          %v284 = vld [vmem:[#allocation3 + $0x170] sm:$0xf]
          %v285 = vld [vmem:[#allocation3 + $0x174] sm:$0xff]
          %v286 = vld [vmem:[#allocation3 + $0x17c] sm:$0xf]
          %v287 = vld [vmem:[#allocation3 + $0x180] sm:$0xff]
          %v288 = vld [vmem:[#allocation3 + $0x188] sm:$0xf]
          %v289 = vld [vmem:[#allocation3 + $0x18c] sm:$0xff]
          %v290 = vld [vmem:[#allocation3 + $0x194] sm:$0xf]
          %v291 = vld [vmem:[#allocation3 + $0x198] sm:$0xff]
          %v292 = vld [vmem:[#allocation3 + $0x1a0] sm:$0xf]
          %v293 = vld [vmem:[#allocation3 + $0x1a4] sm:$0xff]
          %v294 = vld [vmem:[#allocation3 + $0x1ac] sm:$0xf]
          %v295 = vld [vmem:[#allocation3 + $0x1b0] sm:$0xff]
          %v296 = vld [vmem:[#allocation3 + $0x1b8] sm:$0xf]
          %v297 = vld [vmem:[#allocation3 + $0x1bc] sm:$0xff]
          %v298 = vld [vmem:[#allocation3 + $0x1c4] sm:$0xf]
          %v299 = vld [vmem:[#allocation3 + $0x1c8] sm:$0xff]
          %v300 = vld [vmem:[#allocation3 + $0x1d0] sm:$0xf]
          %v301 = vld [vmem:[#allocation3 + $0x1d4] sm:$0xff]
          %v302 = vld [vmem:[#allocation3 + $0x1dc] sm:$0xf]
          %v303 = vld [vmem:[#allocation3 + $0x1e0] sm:$0xff]
          %v304 = vld [vmem:[#allocation3 + $0x1e8] sm:$0xf]
          %v305 = vld [vmem:[#allocation3 + $0x1ec] sm:$0xff]
          %v306 = vld [vmem:[#allocation3 + $0x1f4] sm:$0xf]
          %v307 = vld [vmem:[#allocation3 + $0x1f8] sm:$0xff]
          %v308 = vld [vmem:[#allocation3 + $0x200] sm:$0xf]
          %v309 = vld [vmem:[#allocation3 + $0x204] sm:$0xff]
          %v310 = vld [vmem:[#allocation3 + $0x20c] sm:$0xf]
          %v311 = vld [vmem:[#allocation3 + $0x210] sm:$0xff]
          %v312 = vld [vmem:[#allocation3 + $0x218] sm:$0xf]
          %v313 = vld [vmem:[#allocation3 + $0x21c] sm:$0xff]
          %v314 = vld [vmem:[#allocation3 + $0x224] sm:$0xf]
          %v315 = vld [vmem:[#allocation3 + $0x228] sm:$0xff]
          %v316 = vld [vmem:[#allocation3 + $0x230] sm:$0xf]
          %v317 = vld [vmem:[#allocation3 + $0x234] sm:$0xff]
          %v318 = vld [vmem:[#allocation3 + $0x23c] sm:$0xf]
          %v319 = vld [vmem:[%s0] sm:$0xf]
          %v320 = vld [vmem:[%s0 + $0x4] sm:$0xf]
          %v321 = vld [vmem:[%s0 + $0x8] sm:$0xf]
          %v322 = vld [vmem:[%s0 + $0xc] sm:$0xf]
          %v323 = vld [vmem:[%s0 + $0x10] sm:$0xf]
          %v324 = vld [vmem:[%s0 + $0x14] sm:$0xf]
          %v325 = vld [vmem:[%s0 + $0x18] sm:$0xf]
          %v326 = vld [vmem:[%s0 + $0x1c] sm:$0xf]
          %v327 = vld [vmem:[%s0 + $0x20] sm:$0xf]
          %v328 = vld [vmem:[%s0 + $0x24] sm:$0xf]
          %v329 = vld [vmem:[%s0 + $0x28] sm:$0xf]
          %v330 = vld [vmem:[%s0 + $0x2c] sm:$0xf]
          %v331 = vld [vmem:[%s0 + $0x30] sm:$0xf]
          %v332 = vld [vmem:[%s0 + $0x34] sm:$0xf]
          %v333 = vld [vmem:[%s0 + $0x38] sm:$0xf]
          %v334 = vld [vmem:[%s0 + $0x3c] sm:$0xf]
          %v335 = vld [vmem:[%s0 + $0x40] sm:$0xf]
          %v336 = vld [vmem:[%s0 + $0x44] sm:$0xf]
          %v337 = vld [vmem:[%s0 + $0x48] sm:$0xf]
          %v338 = vld [vmem:[%s0 + $0x4c] sm:$0xf]
          %v339 = vld [vmem:[%s0 + $0x50] sm:$0xf]
          %v340 = vld [vmem:[%s0 + $0x54] sm:$0xf]
          %v341 = vld [vmem:[%s0 + $0x58] sm:$0xf]
          %v342 = vld [vmem:[%s0 + $0x5c] sm:$0xf]
          %v343 = vld [vmem:[%s0 + $0x60] sm:$0xf]
          %v344 = vld [vmem:[%s0 + $0x64] sm:$0xf]
          %v345 = vld [vmem:[%s0 + $0x68] sm:$0xf]
          %v346 = vld [vmem:[%s0 + $0x6c] sm:$0xf]
          %v347 = vld [vmem:[%s0 + $0x70] sm:$0xf]
          %v348 = vld [vmem:[%s0 + $0x74] sm:$0xf]
          %v349 = vld [vmem:[%s0 + $0x78] sm:$0xf]
          %v350 = vld [vmem:[%s0 + $0x7c] sm:$0xf]
          %v351 = vld [vmem:[%s0 + $0x80] sm:$0xf]
          %v352 = vld [vmem:[%s0 + $0x84] sm:$0xf]
          %v353 = vld [vmem:[%s0 + $0x88] sm:$0xf]
          %v354 = vld [vmem:[%s0 + $0x8c] sm:$0xf]
          %v355 = vld [vmem:[%s0 + $0x90] sm:$0xf]
          %v356 = vld [vmem:[%s0 + $0x94] sm:$0xf]
          %v357 = vld [vmem:[%s0 + $0x98] sm:$0xf]
          %v358 = vld [vmem:[%s0 + $0x9c] sm:$0xf]
          %v359 = vld [vmem:[%s0 + $0xa0] sm:$0xf]
          %v360 = vld [vmem:[%s0 + $0xa4] sm:$0xf]
          %v361 = vld [vmem:[%s0 + $0xa8] sm:$0xf]
          %v362 = vld [vmem:[%s0 + $0xac] sm:$0xf]
          %v363 = vld [vmem:[%s0 + $0xb0] sm:$0xf]
          %v364 = vld [vmem:[%s0 + $0xb4] sm:$0xf]
          %v365 = vld [vmem:[%s0 + $0xb8] sm:$0xf]
          %v366 = vld [vmem:[%s0 + $0xbc] sm:$0xf]
          %v463 = vunpack.c.l.b16 %v223
          %v464 = vunpack.c.h.b16 %v223
          %v465 = vunpack.c.l.b16 %v224
          %v466 = vunpack.c.l.b16 %v225
          %v467 = vunpack.c.h.b16 %v225
          %v468 = vunpack.c.l.b16 %v226
          %v469 = vunpack.c.l.b16 %v227
          %v470 = vunpack.c.h.b16 %v227
          %v471 = vunpack.c.l.b16 %v228
          %v472 = vunpack.c.l.b16 %v229
          %v473 = vunpack.c.h.b16 %v229
          %v474 = vunpack.c.l.b16 %v230
          %v475 = vunpack.c.l.b16 %v231
          %v476 = vunpack.c.h.b16 %v231
          %v477 = vunpack.c.l.b16 %v232
          %v478 = vunpack.c.l.b16 %v233
          %v479 = vunpack.c.h.b16 %v233
          %v480 = vunpack.c.l.b16 %v234
          %v481 = vunpack.c.l.b16 %v235
          %v482 = vunpack.c.h.b16 %v235
          %v483 = vunpack.c.l.b16 %v236
          %v484 = vunpack.c.l.b16 %v237
          %v485 = vunpack.c.h.b16 %v237
          %v486 = vunpack.c.l.b16 %v238
          %v487 = vunpack.c.l.b16 %v239
          %v488 = vunpack.c.h.b16 %v239
          %v489 = vunpack.c.l.b16 %v240
          %v490 = vunpack.c.l.b16 %v241
          %v491 = vunpack.c.h.b16 %v241
          %v492 = vunpack.c.l.b16 %v242
          %v493 = vunpack.c.l.b16 %v243
          %v494 = vunpack.c.h.b16 %v243
          %v495 = vunpack.c.l.b16 %v244
          %v496 = vunpack.c.l.b16 %v245
          %v497 = vunpack.c.h.b16 %v245
          %v498 = vunpack.c.l.b16 %v246
          %v499 = vunpack.c.l.b16 %v247
          %v500 = vunpack.c.h.b16 %v247
          %v501 = vunpack.c.l.b16 %v248
          %v502 = vunpack.c.l.b16 %v249
          %v503 = vunpack.c.h.b16 %v249
          %v504 = vunpack.c.l.b16 %v250
          %v505 = vunpack.c.l.b16 %v251
          %v506 = vunpack.c.h.b16 %v251
          %v507 = vunpack.c.l.b16 %v252
          %v508 = vunpack.c.l.b16 %v253
          %v509 = vunpack.c.h.b16 %v253
          %v510 = vunpack.c.l.b16 %v254
          %v511 = vunpack.c.l.b16 %v255
          %v512 = vunpack.c.h.b16 %v255
          %v513 = vunpack.c.l.b16 %v256
          %v514 = vunpack.c.l.b16 %v257
          %v515 = vunpack.c.h.b16 %v257
          %v516 = vunpack.c.l.b16 %v258
          %v517 = vunpack.c.l.b16 %v259
          %v518 = vunpack.c.h.b16 %v259
          %v519 = vunpack.c.l.b16 %v260
          %v520 = vunpack.c.l.b16 %v261
          %v521 = vunpack.c.h.b16 %v261
          %v522 = vunpack.c.l.b16 %v262
          %v523 = vunpack.c.l.b16 %v263
          %v524 = vunpack.c.h.b16 %v263
          %v525 = vunpack.c.l.b16 %v264
          %v526 = vunpack.c.l.b16 %v265
          %v527 = vunpack.c.h.b16 %v265
          %v528 = vunpack.c.l.b16 %v266
          %v529 = vunpack.c.l.b16 %v267
          %v530 = vunpack.c.h.b16 %v267
          %v531 = vunpack.c.l.b16 %v268
          %v532 = vunpack.c.l.b16 %v269
          %v533 = vunpack.c.h.b16 %v269
          %v534 = vunpack.c.l.b16 %v270
          %v535 = vunpack.c.l.b16 %v271
          %v536 = vunpack.c.h.b16 %v271
          %v537 = vunpack.c.l.b16 %v272
          %v538 = vunpack.c.l.b16 %v273
          %v539 = vunpack.c.h.b16 %v273
          %v540 = vunpack.c.l.b16 %v274
          %v541 = vunpack.c.l.b16 %v275
          %v542 = vunpack.c.h.b16 %v275
          %v543 = vunpack.c.l.b16 %v276
          %v544 = vunpack.c.l.b16 %v277
          %v545 = vunpack.c.h.b16 %v277
          %v546 = vunpack.c.l.b16 %v278
          %v547 = vunpack.c.l.b16 %v279
          %v548 = vunpack.c.h.b16 %v279
          %v549 = vunpack.c.l.b16 %v280
          %v550 = vunpack.c.l.b16 %v281
          %v551 = vunpack.c.h.b16 %v281
          %v552 = vunpack.c.l.b16 %v282
          %v553 = vunpack.c.l.b16 %v283
          %v554 = vunpack.c.h.b16 %v283
          %v555 = vunpack.c.l.b16 %v284
          %v556 = vunpack.c.l.b16 %v285
          %v557 = vunpack.c.h.b16 %v285
          %v558 = vunpack.c.l.b16 %v286
          %v559 = vunpack.c.l.b16 %v287
          %v560 = vunpack.c.h.b16 %v287
          %v561 = vunpack.c.l.b16 %v288
          %v562 = vunpack.c.l.b16 %v289
          %v563 = vunpack.c.h.b16 %v289
          %v564 = vunpack.c.l.b16 %v290
          %v565 = vunpack.c.l.b16 %v291
          %v566 = vunpack.c.h.b16 %v291
          %v567 = vunpack.c.l.b16 %v292
          %v568 = vunpack.c.l.b16 %v293
          %v569 = vunpack.c.h.b16 %v293
          %v570 = vunpack.c.l.b16 %v294
          %v571 = vunpack.c.l.b16 %v295
          %v572 = vunpack.c.h.b16 %v295
          %v573 = vunpack.c.l.b16 %v296
          %v574 = vunpack.c.l.b16 %v297
          %v575 = vunpack.c.h.b16 %v297
          %v576 = vunpack.c.l.b16 %v298
          %v577 = vunpack.c.l.b16 %v299
          %v578 = vunpack.c.h.b16 %v299
          %v579 = vunpack.c.l.b16 %v300
          %v580 = vunpack.c.l.b16 %v301
          %v581 = vunpack.c.h.b16 %v301
          %v582 = vunpack.c.l.b16 %v302
          %v583 = vunpack.c.l.b16 %v303
          %v584 = vunpack.c.h.b16 %v303
          %v585 = vunpack.c.l.b16 %v304
          %v586 = vunpack.c.l.b16 %v305
          %v587 = vunpack.c.h.b16 %v305
          %v588 = vunpack.c.l.b16 %v306
          %v589 = vunpack.c.l.b16 %v307
          %v590 = vunpack.c.h.b16 %v307
          %v591 = vunpack.c.l.b16 %v308
          %v592 = vunpack.c.l.b16 %v309
          %v593 = vunpack.c.h.b16 %v309
          %v594 = vunpack.c.l.b16 %v310
          %v595 = vunpack.c.l.b16 %v311
          %v596 = vunpack.c.h.b16 %v311
          %v597 = vunpack.c.l.b16 %v312
          %v598 = vunpack.c.l.b16 %v313
          %v599 = vunpack.c.h.b16 %v313
          %v600 = vunpack.c.l.b16 %v314
          %v601 = vunpack.c.l.b16 %v315
          %v602 = vunpack.c.h.b16 %v315
          %v603 = vunpack.c.l.b16 %v316
          %v604 = vunpack.c.l.b16 %v317
          %v605 = vunpack.c.h.b16 %v317
          %v606 = vunpack.c.l.b16 %v318
          %v607 = vpack.c.b16 %v466, %v463
          %v608 = vpack.c.b16 %v467, %v464
          %v609 = vpack.c.b16 %v468, %v465
          %v610 = vpack.c.b16 %v472, %v469
          %v611 = vpack.c.b16 %v473, %v470
          %v612 = vpack.c.b16 %v474, %v471
          %v613 = vpack.c.b16 %v478, %v475
          %v614 = vpack.c.b16 %v479, %v476
          %v615 = vpack.c.b16 %v480, %v477
          %v616 = vpack.c.b16 %v484, %v481
          %v617 = vpack.c.b16 %v485, %v482
          %v618 = vpack.c.b16 %v486, %v483
          %v619 = vpack.c.b16 %v490, %v487
          %v620 = vpack.c.b16 %v491, %v488
          %v621 = vpack.c.b16 %v492, %v489
          %v622 = vpack.c.b16 %v496, %v493
          %v623 = vpack.c.b16 %v497, %v494
          %v624 = vpack.c.b16 %v498, %v495
          %v625 = vpack.c.b16 %v502, %v499
          %v626 = vpack.c.b16 %v503, %v500
          %v627 = vpack.c.b16 %v504, %v501
          %v628 = vpack.c.b16 %v508, %v505
          %v629 = vpack.c.b16 %v509, %v506
          %v630 = vpack.c.b16 %v510, %v507
          %v631 = vpack.c.b16 %v514, %v511
          %v632 = vpack.c.b16 %v515, %v512
          %v633 = vpack.c.b16 %v516, %v513
          %v634 = vpack.c.b16 %v520, %v517
          %v635 = vpack.c.b16 %v521, %v518
          %v636 = vpack.c.b16 %v522, %v519
          %v637 = vpack.c.b16 %v526, %v523
          %v638 = vpack.c.b16 %v527, %v524
          %v639 = vpack.c.b16 %v528, %v525
          %v640 = vpack.c.b16 %v532, %v529
          %v641 = vpack.c.b16 %v533, %v530
          %v642 = vpack.c.b16 %v534, %v531
          %v643 = vpack.c.b16 %v538, %v535
          %v644 = vpack.c.b16 %v539, %v536
          %v645 = vpack.c.b16 %v540, %v537
          %v646 = vpack.c.b16 %v544, %v541
          %v647 = vpack.c.b16 %v545, %v542
          %v648 = vpack.c.b16 %v546, %v543
          %v649 = vpack.c.b16 %v550, %v547
          %v650 = vpack.c.b16 %v551, %v548
          %v651 = vpack.c.b16 %v552, %v549
          %v652 = vpack.c.b16 %v556, %v553
          %v653 = vpack.c.b16 %v557, %v554
          %v654 = vpack.c.b16 %v558, %v555
          %v655 = vpack.c.b16 %v562, %v559
          %v656 = vpack.c.b16 %v563, %v560
          %v657 = vpack.c.b16 %v564, %v561
          %v658 = vpack.c.b16 %v568, %v565
          %v659 = vpack.c.b16 %v569, %v566
          %v660 = vpack.c.b16 %v570, %v567
          %v661 = vpack.c.b16 %v574, %v571
          %v662 = vpack.c.b16 %v575, %v572
          %v663 = vpack.c.b16 %v576, %v573
          %v664 = vpack.c.b16 %v580, %v577
          %v665 = vpack.c.b16 %v581, %v578
          %v666 = vpack.c.b16 %v582, %v579
          %v667 = vpack.c.b16 %v586, %v583
          %v668 = vpack.c.b16 %v587, %v584
          %v669 = vpack.c.b16 %v588, %v585
          %v670 = vpack.c.b16 %v592, %v589
          %v671 = vpack.c.b16 %v593, %v590
          %v672 = vpack.c.b16 %v594, %v591
          %v673 = vpack.c.b16 %v598, %v595
          %v674 = vpack.c.b16 %v599, %v596
          %v675 = vpack.c.b16 %v600, %v597
          %v676 = vpack.c.b16 %v604, %v601
          %v677 = vpack.c.b16 %v605, %v602
          %v678 = vpack.c.b16 %v606, %v603
          %v799 = vunpack.c.l.b16 %v319
          %v800 = vunpack.c.l.b16 %v320
          %v801 = vunpack.c.l.b16 %v321
          %v802 = vunpack.c.l.b16 %v322
          %v803 = vunpack.c.l.b16 %v323
          %v804 = vunpack.c.l.b16 %v324
          %v805 = vunpack.c.l.b16 %v325
          %v806 = vunpack.c.l.b16 %v326
          %v807 = vunpack.c.l.b16 %v327
          %v808 = vunpack.c.l.b16 %v328
          %v809 = vunpack.c.l.b16 %v329
          %v810 = vunpack.c.l.b16 %v330
          %v811 = vunpack.c.l.b16 %v331
          %v812 = vunpack.c.l.b16 %v332
          %v813 = vunpack.c.l.b16 %v333
          %v814 = vunpack.c.l.b16 %v334
          %v815 = vunpack.c.l.b16 %v335
          %v816 = vunpack.c.l.b16 %v336
          %v817 = vunpack.c.l.b16 %v337
          %v818 = vunpack.c.l.b16 %v338
          %v819 = vunpack.c.l.b16 %v339
          %v820 = vunpack.c.l.b16 %v340
          %v821 = vunpack.c.l.b16 %v341
          %v822 = vunpack.c.l.b16 %v342
          %v823 = vunpack.c.l.b16 %v343
          %v824 = vunpack.c.l.b16 %v344
          %v825 = vunpack.c.l.b16 %v345
          %v826 = vunpack.c.l.b16 %v346
          %v827 = vunpack.c.l.b16 %v347
          %v828 = vunpack.c.l.b16 %v348
          %v829 = vunpack.c.l.b16 %v349
          %v830 = vunpack.c.l.b16 %v350
          %v831 = vunpack.c.l.b16 %v351
          %v832 = vunpack.c.l.b16 %v352
          %v833 = vunpack.c.l.b16 %v353
          %v834 = vunpack.c.l.b16 %v354
          %v835 = vunpack.c.l.b16 %v355
          %v836 = vunpack.c.l.b16 %v356
          %v837 = vunpack.c.l.b16 %v357
          %v838 = vunpack.c.l.b16 %v358
          %v839 = vunpack.c.l.b16 %v359
          %v840 = vunpack.c.l.b16 %v360
          %v841 = vunpack.c.l.b16 %v361
          %v842 = vunpack.c.l.b16 %v362
          %v843 = vunpack.c.l.b16 %v363
          %v844 = vunpack.c.l.b16 %v364
          %v845 = vunpack.c.l.b16 %v365
          %v846 = vunpack.c.l.b16 %v366
          %v847 = vpack.c.b16 %v800, %v799
          %v848 = vpack.c.b16 %v802, %v801
          %v849 = vpack.c.b16 %v804, %v803
          %v850 = vpack.c.b16 %v806, %v805
          %v851 = vpack.c.b16 %v808, %v807
          %v852 = vpack.c.b16 %v810, %v809
          %v853 = vpack.c.b16 %v812, %v811
          %v854 = vpack.c.b16 %v814, %v813
          %v855 = vpack.c.b16 %v816, %v815
          %v856 = vpack.c.b16 %v818, %v817
          %v857 = vpack.c.b16 %v820, %v819
          %v858 = vpack.c.b16 %v822, %v821
          %v859 = vpack.c.b16 %v824, %v823
          %v860 = vpack.c.b16 %v826, %v825
          %v861 = vpack.c.b16 %v828, %v827
          %v862 = vpack.c.b16 %v830, %v829
          %v863 = vpack.c.b16 %v832, %v831
          %v864 = vpack.c.b16 %v834, %v833
          %v865 = vpack.c.b16 %v836, %v835
          %v866 = vpack.c.b16 %v838, %v837
          %v867 = vpack.c.b16 %v840, %v839
          %v868 = vpack.c.b16 %v842, %v841
          %v869 = vpack.c.b16 %v844, %v843
          %v870 = vpack.c.b16 %v846, %v845
          %895 = vmatpush.bf16.msra.mxu0 %v854
          %896 = vmatpush.bf16.msra.mxu0 %v853
          %897 = vmatpush.bf16.msra.mxu0 %v852
          %898 = vmatpush.bf16.msra.mxu0 %v851
          %899 = vmatpush.bf16.msra.mxu0 %v850
          %900 = vmatpush.bf16.msra.mxu0 %v849
          %901 = vmatpush.bf16.msra.mxu0 %v848
          %902 = vmatpush.bf16.msra.mxu0 %v847
          %903 = vmatmul.bf16.gmra.mxu0 %v607
          %v904 = vpop.f32.mrf.mxu0
          %v905 = vadd.f32 0.0, %v904
          %v906 = vpop.f32.mrf.mxu0
          %v907 = vadd.f32 0.0, %v906
          %908 = vmatmul.bf16.gmra.mxu0 %v610
          %v909 = vpop.f32.mrf.mxu0
          %v910 = vadd.f32 0.0, %v909
          %v911 = vpop.f32.mrf.mxu0
          %v912 = vadd.f32 0.0, %v911
          %913 = vmatmul.bf16.gmra.mxu0 %v613
          %v914 = vpop.f32.mrf.mxu0
          %v915 = vadd.f32 0.0, %v914
          %v916 = vpop.f32.mrf.mxu0
          %v917 = vadd.f32 0.0, %v916
          %918 = vmatmul.bf16.gmra.mxu0 %v616
          %v919 = vpop.f32.mrf.mxu0
          %v920 = vadd.f32 0.0, %v919
          %v921 = vpop.f32.mrf.mxu0
          %v922 = vadd.f32 0.0, %v921
          %923 = vmatmul.bf16.gmra.mxu0 %v619
          %v924 = vpop.f32.mrf.mxu0
          %v925 = vadd.f32 0.0, %v924
          %v926 = vpop.f32.mrf.mxu0
          %v927 = vadd.f32 0.0, %v926
          %928 = vmatmul.bf16.gmra.mxu0 %v622
          %v929 = vpop.f32.mrf.mxu0
          %v930 = vadd.f32 0.0, %v929
          %v931 = vpop.f32.mrf.mxu0
          %v932 = vadd.f32 0.0, %v931
          %933 = vmatmul.bf16.gmra.mxu0 %v625
          %v934 = vpop.f32.mrf.mxu0
          %v935 = vadd.f32 0.0, %v934
          %v936 = vpop.f32.mrf.mxu0
          %v937 = vadd.f32 0.0, %v936
          %938 = vmatmul.bf16.gmra.mxu0 %v628
          %v939 = vpop.f32.mrf.mxu0
          %v940 = vadd.f32 0.0, %v939
          %v941 = vpop.f32.mrf.mxu0
          %v942 = vadd.f32 0.0, %v941
          %943 = vmatmul.bf16.gmra.mxu0 %v631
          %v944 = vpop.f32.mrf.mxu0
          %v945 = vadd.f32 0.0, %v944
          %v946 = vpop.f32.mrf.mxu0
          %v947 = vadd.f32 0.0, %v946
          %948 = vmatmul.bf16.gmra.mxu0 %v634
          %v949 = vpop.f32.mrf.mxu0
          %v950 = vadd.f32 0.0, %v949
          %v951 = vpop.f32.mrf.mxu0
          %v952 = vadd.f32 0.0, %v951
          %953 = vmatmul.bf16.gmra.mxu0 %v637
          %v954 = vpop.f32.mrf.mxu0
          %v955 = vadd.f32 0.0, %v954
          %v956 = vpop.f32.mrf.mxu0
          %v957 = vadd.f32 0.0, %v956
          %958 = vmatmul.bf16.gmra.mxu0 %v640
          %v959 = vpop.f32.mrf.mxu0
          %v960 = vadd.f32 0.0, %v959
          %v961 = vpop.f32.mrf.mxu0
          %v962 = vadd.f32 0.0, %v961
          %963 = vmatmul.bf16.gmra.mxu0 %v643
          %v964 = vpop.f32.mrf.mxu0
          %v965 = vadd.f32 0.0, %v964
          %v966 = vpop.f32.mrf.mxu0
          %v967 = vadd.f32 0.0, %v966
          %968 = vmatmul.bf16.gmra.mxu0 %v646
          %v969 = vpop.f32.mrf.mxu0
          %v970 = vadd.f32 0.0, %v969
          %v971 = vpop.f32.mrf.mxu0
          %v972 = vadd.f32 0.0, %v971
          %973 = vmatmul.bf16.gmra.mxu0 %v649
          %v974 = vpop.f32.mrf.mxu0
          %v975 = vadd.f32 0.0, %v974
          %v976 = vpop.f32.mrf.mxu0
          %v977 = vadd.f32 0.0, %v976
          %978 = vmatmul.bf16.gmra.mxu0 %v652
          %v979 = vpop.f32.mrf.mxu0
          %v980 = vadd.f32 0.0, %v979
          %v981 = vpop.f32.mrf.mxu0
          %v982 = vadd.f32 0.0, %v981
          %983 = vmatmul.bf16.gmra.mxu0 %v655
          %v984 = vpop.f32.mrf.mxu0
          %v985 = vadd.f32 0.0, %v984
          %v986 = vpop.f32.mrf.mxu0
          %v987 = vadd.f32 0.0, %v986
          %988 = vmatmul.bf16.gmra.mxu0 %v658
          %v989 = vpop.f32.mrf.mxu0
          %v990 = vadd.f32 0.0, %v989
          %v991 = vpop.f32.mrf.mxu0
          %v992 = vadd.f32 0.0, %v991
          %993 = vmatmul.bf16.gmra.mxu0 %v661
          %v994 = vpop.f32.mrf.mxu0
          %v995 = vadd.f32 0.0, %v994
          %v996 = vpop.f32.mrf.mxu0
          %v997 = vadd.f32 0.0, %v996
          %998 = vmatmul.bf16.gmra.mxu0 %v664
          %v999 = vpop.f32.mrf.mxu0
          %v1000 = vadd.f32 0.0, %v999
          %v1001 = vpop.f32.mrf.mxu0
          %v1002 = vadd.f32 0.0, %v1001
          %1003 = vmatmul.bf16.gmra.mxu0 %v667
          %v1004 = vpop.f32.mrf.mxu0
          %v1005 = vadd.f32 0.0, %v1004
          %v1006 = vpop.f32.mrf.mxu0
          %v1007 = vadd.f32 0.0, %v1006
          %1008 = vmatmul.bf16.gmra.mxu0 %v670
          %v1009 = vpop.f32.mrf.mxu0
          %v1010 = vadd.f32 0.0, %v1009
          %v1011 = vpop.f32.mrf.mxu0
          %v1012 = vadd.f32 0.0, %v1011
          %1013 = vmatmul.bf16.gmra.mxu0 %v673
          %v1014 = vpop.f32.mrf.mxu0
          %v1015 = vadd.f32 0.0, %v1014
          %v1016 = vpop.f32.mrf.mxu0
          %v1017 = vadd.f32 0.0, %v1016
          %1018 = vmatmul.bf16.gmra.mxu0 %v676
          %v1019 = vpop.f32.mrf.mxu0
          %v1020 = vadd.f32 0.0, %v1019
          %v1021 = vpop.f32.mrf.mxu0
          %v1022 = vadd.f32 0.0, %v1021
          %1023 = vdwg.mxu0
          %1024 = vmatpush.bf16.msra.mxu0 %v862
          %1025 = vmatpush.bf16.msra.mxu0 %v861
          %1026 = vmatpush.bf16.msra.mxu0 %v860
          %1027 = vmatpush.bf16.msra.mxu0 %v859
          %1028 = vmatpush.bf16.msra.mxu0 %v858
          %1029 = vmatpush.bf16.msra.mxu0 %v857
          %1030 = vmatpush.bf16.msra.mxu0 %v856
          %1031 = vmatpush.bf16.msra.mxu0 %v855
          %1032 = vmatmul.bf16.gmra.mxu0 %v608
          %v1033 = vpop.f32.mrf.mxu0
          %v1034 = vadd.f32 %v905, %v1033
          %v1035 = vpop.f32.mrf.mxu0
          %v1036 = vadd.f32 %v907, %v1035
          %1037 = vmatmul.bf16.gmra.mxu0 %v611
          %v1038 = vpop.f32.mrf.mxu0
          %v1039 = vadd.f32 %v910, %v1038
          %v1040 = vpop.f32.mrf.mxu0
          %v1041 = vadd.f32 %v912, %v1040
          %1042 = vmatmul.bf16.gmra.mxu0 %v614
          %v1043 = vpop.f32.mrf.mxu0
          %v1044 = vadd.f32 %v915, %v1043
          %v1045 = vpop.f32.mrf.mxu0
          %v1046 = vadd.f32 %v917, %v1045
          %1047 = vmatmul.bf16.gmra.mxu0 %v617
          %v1048 = vpop.f32.mrf.mxu0
          %v1049 = vadd.f32 %v920, %v1048
          %v1050 = vpop.f32.mrf.mxu0
          %v1051 = vadd.f32 %v922, %v1050
          %1052 = vmatmul.bf16.gmra.mxu0 %v620
          %v1053 = vpop.f32.mrf.mxu0
          %v1054 = vadd.f32 %v925, %v1053
          %v1055 = vpop.f32.mrf.mxu0
          %v1056 = vadd.f32 %v927, %v1055
          %1057 = vmatmul.bf16.gmra.mxu0 %v623
          %v1058 = vpop.f32.mrf.mxu0
          %v1059 = vadd.f32 %v930, %v1058
          %v1060 = vpop.f32.mrf.mxu0
          %v1061 = vadd.f32 %v932, %v1060
          %1062 = vmatmul.bf16.gmra.mxu0 %v626
          %v1063 = vpop.f32.mrf.mxu0
          %v1064 = vadd.f32 %v935, %v1063
          %v1065 = vpop.f32.mrf.mxu0
          %v1066 = vadd.f32 %v937, %v1065
          %1067 = vmatmul.bf16.gmra.mxu0 %v629
          %v1068 = vpop.f32.mrf.mxu0
          %v1069 = vadd.f32 %v940, %v1068
          %v1070 = vpop.f32.mrf.mxu0
          %v1071 = vadd.f32 %v942, %v1070
          %1072 = vmatmul.bf16.gmra.mxu0 %v632
          %v1073 = vpop.f32.mrf.mxu0
          %v1074 = vadd.f32 %v945, %v1073
          %v1075 = vpop.f32.mrf.mxu0
          %v1076 = vadd.f32 %v947, %v1075
          %1077 = vmatmul.bf16.gmra.mxu0 %v635
          %v1078 = vpop.f32.mrf.mxu0
          %v1079 = vadd.f32 %v950, %v1078
          %v1080 = vpop.f32.mrf.mxu0
          %v1081 = vadd.f32 %v952, %v1080
          %1082 = vmatmul.bf16.gmra.mxu0 %v638
          %v1083 = vpop.f32.mrf.mxu0
          %v1084 = vadd.f32 %v955, %v1083
          %v1085 = vpop.f32.mrf.mxu0
          %v1086 = vadd.f32 %v957, %v1085
          %1087 = vmatmul.bf16.gmra.mxu0 %v641
          %v1088 = vpop.f32.mrf.mxu0
          %v1089 = vadd.f32 %v960, %v1088
          %v1090 = vpop.f32.mrf.mxu0
          %v1091 = vadd.f32 %v962, %v1090
          %1092 = vmatmul.bf16.gmra.mxu0 %v644
          %v1093 = vpop.f32.mrf.mxu0
          %v1094 = vadd.f32 %v965, %v1093
          %v1095 = vpop.f32.mrf.mxu0
          %v1096 = vadd.f32 %v967, %v1095
          %1097 = vmatmul.bf16.gmra.mxu0 %v647
          %v1098 = vpop.f32.mrf.mxu0
          %v1099 = vadd.f32 %v970, %v1098
          %v1100 = vpop.f32.mrf.mxu0
          %v1101 = vadd.f32 %v972, %v1100
          %1102 = vmatmul.bf16.gmra.mxu0 %v650
          %v1103 = vpop.f32.mrf.mxu0
          %v1104 = vadd.f32 %v975, %v1103
          %v1105 = vpop.f32.mrf.mxu0
          %v1106 = vadd.f32 %v977, %v1105
          %1107 = vmatmul.bf16.gmra.mxu0 %v653
          %v1108 = vpop.f32.mrf.mxu0
          %v1109 = vadd.f32 %v980, %v1108
          %v1110 = vpop.f32.mrf.mxu0
          %v1111 = vadd.f32 %v982, %v1110
          %1112 = vmatmul.bf16.gmra.mxu0 %v656
          %v1113 = vpop.f32.mrf.mxu0
          %v1114 = vadd.f32 %v985, %v1113
          %v1115 = vpop.f32.mrf.mxu0
          %v1116 = vadd.f32 %v987, %v1115
          %1117 = vmatmul.bf16.gmra.mxu0 %v659
          %v1118 = vpop.f32.mrf.mxu0
          %v1119 = vadd.f32 %v990, %v1118
          %v1120 = vpop.f32.mrf.mxu0
          %v1121 = vadd.f32 %v992, %v1120
          %1122 = vmatmul.bf16.gmra.mxu0 %v662
          %v1123 = vpop.f32.mrf.mxu0
          %v1124 = vadd.f32 %v995, %v1123
          %v1125 = vpop.f32.mrf.mxu0
          %v1126 = vadd.f32 %v997, %v1125
          %1127 = vmatmul.bf16.gmra.mxu0 %v665
          %v1128 = vpop.f32.mrf.mxu0
          %v1129 = vadd.f32 %v1000, %v1128
          %v1130 = vpop.f32.mrf.mxu0
          %v1131 = vadd.f32 %v1002, %v1130
          %1132 = vmatmul.bf16.gmra.mxu0 %v668
          %v1133 = vpop.f32.mrf.mxu0
          %v1134 = vadd.f32 %v1005, %v1133
          %v1135 = vpop.f32.mrf.mxu0
          %v1136 = vadd.f32 %v1007, %v1135
          %1137 = vmatmul.bf16.gmra.mxu0 %v671
          %v1138 = vpop.f32.mrf.mxu0
          %v1139 = vadd.f32 %v1010, %v1138
          %v1140 = vpop.f32.mrf.mxu0
          %v1141 = vadd.f32 %v1012, %v1140
          %1142 = vmatmul.bf16.gmra.mxu0 %v674
          %v1143 = vpop.f32.mrf.mxu0
          %v1144 = vadd.f32 %v1015, %v1143
          %v1145 = vpop.f32.mrf.mxu0
          %v1146 = vadd.f32 %v1017, %v1145
          %1147 = vmatmul.bf16.gmra.mxu0 %v677
          %v1148 = vpop.f32.mrf.mxu0
          %v1149 = vadd.f32 %v1020, %v1148
          %v1150 = vpop.f32.mrf.mxu0
          %v1151 = vadd.f32 %v1022, %v1150
          %1152 = vdwg.mxu0
          %1153 = vmatpush.bf16.msra.mxu0 %v870
          %1154 = vmatpush.bf16.msra.mxu0 %v869
          %1155 = vmatpush.bf16.msra.mxu0 %v868
          %1156 = vmatpush.bf16.msra.mxu0 %v867
          %1157 = vmatpush.bf16.msra.mxu0 %v866
          %1158 = vmatpush.bf16.msra.mxu0 %v865
          %1159 = vmatpush.bf16.msra.mxu0 %v864
          %1160 = vmatpush.bf16.msra.mxu0 %v863
          %1161 = vmatmul.bf16.gmra.mxu0 %v609
          %v1162 = vpop.f32.mrf.mxu0
          %v1163 = vadd.f32 %v1034, %v1162
          %v1164 = vpop.f32.mrf.mxu0
          %v1165 = vadd.f32 %v1036, %v1164
          %1166 = vmatmul.bf16.gmra.mxu0 %v612
          %v1167 = vpop.f32.mrf.mxu0
          %v1168 = vadd.f32 %v1039, %v1167
          %v1169 = vpop.f32.mrf.mxu0
          %v1170 = vadd.f32 %v1041, %v1169
          %1171 = vmatmul.bf16.gmra.mxu0 %v615
          %v1172 = vpop.f32.mrf.mxu0
          %v1173 = vadd.f32 %v1044, %v1172
          %v1174 = vpop.f32.mrf.mxu0
          %v1175 = vadd.f32 %v1046, %v1174
          %1176 = vmatmul.bf16.gmra.mxu0 %v618
          %v1177 = vpop.f32.mrf.mxu0
          %v1178 = vadd.f32 %v1049, %v1177
          %v1179 = vpop.f32.mrf.mxu0
          %v1180 = vadd.f32 %v1051, %v1179
          %1181 = vmatmul.bf16.gmra.mxu0 %v621
          %v1182 = vpop.f32.mrf.mxu0
          %v1183 = vadd.f32 %v1054, %v1182
          %v1184 = vpop.f32.mrf.mxu0
          %v1185 = vadd.f32 %v1056, %v1184
          %1186 = vmatmul.bf16.gmra.mxu0 %v624
          %v1187 = vpop.f32.mrf.mxu0
          %v1188 = vadd.f32 %v1059, %v1187
          %v1189 = vpop.f32.mrf.mxu0
          %v1190 = vadd.f32 %v1061, %v1189
          %1191 = vmatmul.bf16.gmra.mxu0 %v627
          %v1192 = vpop.f32.mrf.mxu0
          %v1193 = vadd.f32 %v1064, %v1192
          %v1194 = vpop.f32.mrf.mxu0
          %v1195 = vadd.f32 %v1066, %v1194
          %1196 = vmatmul.bf16.gmra.mxu0 %v630
          %v1197 = vpop.f32.mrf.mxu0
          %v1198 = vadd.f32 %v1069, %v1197
          %v1199 = vpop.f32.mrf.mxu0
          %v1200 = vadd.f32 %v1071, %v1199
          %1201 = vmatmul.bf16.gmra.mxu0 %v633
          %v1202 = vpop.f32.mrf.mxu0
          %v1203 = vadd.f32 %v1074, %v1202
          %v1204 = vpop.f32.mrf.mxu0
          %v1205 = vadd.f32 %v1076, %v1204
          %1206 = vmatmul.bf16.gmra.mxu0 %v636
          %v1207 = vpop.f32.mrf.mxu0
          %v1208 = vadd.f32 %v1079, %v1207
          %v1209 = vpop.f32.mrf.mxu0
          %v1210 = vadd.f32 %v1081, %v1209
          %1211 = vmatmul.bf16.gmra.mxu0 %v639
          %v1212 = vpop.f32.mrf.mxu0
          %v1213 = vadd.f32 %v1084, %v1212
          %v1214 = vpop.f32.mrf.mxu0
          %v1215 = vadd.f32 %v1086, %v1214
          %1216 = vmatmul.bf16.gmra.mxu0 %v642
          %v1217 = vpop.f32.mrf.mxu0
          %v1218 = vadd.f32 %v1089, %v1217
          %v1219 = vpop.f32.mrf.mxu0
          %v1220 = vadd.f32 %v1091, %v1219
          %1221 = vmatmul.bf16.gmra.mxu0 %v645
          %v1222 = vpop.f32.mrf.mxu0
          %v1223 = vadd.f32 %v1094, %v1222
          %v1224 = vpop.f32.mrf.mxu0
          %v1225 = vadd.f32 %v1096, %v1224
          %1226 = vmatmul.bf16.gmra.mxu0 %v648
          %v1227 = vpop.f32.mrf.mxu0
          %v1228 = vadd.f32 %v1099, %v1227
          %v1229 = vpop.f32.mrf.mxu0
          %v1230 = vadd.f32 %v1101, %v1229
          %1231 = vmatmul.bf16.gmra.mxu0 %v651
          %v1232 = vpop.f32.mrf.mxu0
          %v1233 = vadd.f32 %v1104, %v1232
          %v1234 = vpop.f32.mrf.mxu0
          %v1235 = vadd.f32 %v1106, %v1234
          %1236 = vmatmul.bf16.gmra.mxu0 %v654
          %v1237 = vpop.f32.mrf.mxu0
          %v1238 = vadd.f32 %v1109, %v1237
          %v1239 = vpop.f32.mrf.mxu0
          %v1240 = vadd.f32 %v1111, %v1239
          %1241 = vmatmul.bf16.gmra.mxu0 %v657
          %v1242 = vpop.f32.mrf.mxu0
          %v1243 = vadd.f32 %v1114, %v1242
          %v1244 = vpop.f32.mrf.mxu0
          %v1245 = vadd.f32 %v1116, %v1244
          %1246 = vmatmul.bf16.gmra.mxu0 %v660
          %v1247 = vpop.f32.mrf.mxu0
          %v1248 = vadd.f32 %v1119, %v1247
          %v1249 = vpop.f32.mrf.mxu0
          %v1250 = vadd.f32 %v1121, %v1249
          %1251 = vmatmul.bf16.gmra.mxu0 %v663
          %v1252 = vpop.f32.mrf.mxu0
          %v1253 = vadd.f32 %v1124, %v1252
          %v1254 = vpop.f32.mrf.mxu0
          %v1255 = vadd.f32 %v1126, %v1254
          %1256 = vmatmul.bf16.gmra.mxu0 %v666
          %v1257 = vpop.f32.mrf.mxu0
          %v1258 = vadd.f32 %v1129, %v1257
          %v1259 = vpop.f32.mrf.mxu0
          %v1260 = vadd.f32 %v1131, %v1259
          %1261 = vmatmul.bf16.gmra.mxu0 %v669
          %v1262 = vpop.f32.mrf.mxu0
          %v1263 = vadd.f32 %v1134, %v1262
          %v1264 = vpop.f32.mrf.mxu0
          %v1265 = vadd.f32 %v1136, %v1264
          %1266 = vmatmul.bf16.gmra.mxu0 %v672
          %v1267 = vpop.f32.mrf.mxu0
          %v1268 = vadd.f32 %v1139, %v1267
          %v1269 = vpop.f32.mrf.mxu0
          %v1270 = vadd.f32 %v1141, %v1269
          %1271 = vmatmul.bf16.gmra.mxu0 %v675
          %v1272 = vpop.f32.mrf.mxu0
          %v1273 = vadd.f32 %v1144, %v1272
          %v1274 = vpop.f32.mrf.mxu0
          %v1275 = vadd.f32 %v1146, %v1274
          %1276 = vmatmul.bf16.gmra.mxu0 %v678
          %v1277 = vpop.f32.mrf.mxu0
          %v1278 = vadd.f32 %v1149, %v1277
          %v1279 = vpop.f32.mrf.mxu0
          %v1280 = vadd.f32 %v1151, %v1279
          %1281 = vdwg.mxu0
          %vm1282 = vcmp.ge.f32.partialorder %v1163, 0.0
          %vm1283 = vcmp.ge.f32.partialorder %v1165, 0.0
          %vm1284 = vcmp.ge.f32.partialorder %v1168, 0.0
          %vm1285 = vcmp.ge.f32.partialorder %v1170, 0.0
          %vm1286 = vcmp.ge.f32.partialorder %v1173, 0.0
          %vm1287 = vcmp.ge.f32.partialorder %v1175, 0.0
          %vm1288 = vcmp.ge.f32.partialorder %v1178, 0.0
          %vm1289 = vcmp.ge.f32.partialorder %v1180, 0.0
          %vm1290 = vcmp.ge.f32.partialorder %v1183, 0.0
          %vm1291 = vcmp.ge.f32.partialorder %v1185, 0.0
          %vm1292 = vcmp.ge.f32.partialorder %v1188, 0.0
          %vm1293 = vcmp.ge.f32.partialorder %v1190, 0.0
          %vm1294 = vcmp.ge.f32.partialorder %v1193, 0.0
          %vm1295 = vcmp.ge.f32.partialorder %v1195, 0.0
          %vm1296 = vcmp.ge.f32.partialorder %v1198, 0.0
          %vm1297 = vcmp.ge.f32.partialorder %v1200, 0.0
          %vm1298 = vcmp.ge.f32.partialorder %v1203, 0.0
          %vm1299 = vcmp.ge.f32.partialorder %v1205, 0.0
          %vm1300 = vcmp.ge.f32.partialorder %v1208, 0.0
          %vm1301 = vcmp.ge.f32.partialorder %v1210, 0.0
          %vm1302 = vcmp.ge.f32.partialorder %v1213, 0.0
          %vm1303 = vcmp.ge.f32.partialorder %v1215, 0.0
          %vm1304 = vcmp.ge.f32.partialorder %v1218, 0.0
          %vm1305 = vcmp.ge.f32.partialorder %v1220, 0.0
          %vm1306 = vcmp.ge.f32.partialorder %v1223, 0.0
          %vm1307 = vcmp.ge.f32.partialorder %v1225, 0.0
          %vm1308 = vcmp.ge.f32.partialorder %v1228, 0.0
          %vm1309 = vcmp.ge.f32.partialorder %v1230, 0.0
          %vm1310 = vcmp.ge.f32.partialorder %v1233, 0.0
          %vm1311 = vcmp.ge.f32.partialorder %v1235, 0.0
          %vm1312 = vcmp.ge.f32.partialorder %v1238, 0.0
          %vm1313 = vcmp.ge.f32.partialorder %v1240, 0.0
          %vm1314 = vcmp.ge.f32.partialorder %v1243, 0.0
          %vm1315 = vcmp.ge.f32.partialorder %v1245, 0.0
          %vm1316 = vcmp.ge.f32.partialorder %v1248, 0.0
          %vm1317 = vcmp.ge.f32.partialorder %v1250, 0.0
          %vm1318 = vcmp.ge.f32.partialorder %v1253, 0.0
          %vm1319 = vcmp.ge.f32.partialorder %v1255, 0.0
          %vm1320 = vcmp.ge.f32.partialorder %v1258, 0.0
          %vm1321 = vcmp.ge.f32.partialorder %v1260, 0.0
          %vm1322 = vcmp.ge.f32.partialorder %v1263, 0.0
          %vm1323 = vcmp.ge.f32.partialorder %v1265, 0.0
          %vm1324 = vcmp.ge.f32.partialorder %v1268, 0.0
          %vm1325 = vcmp.ge.f32.partialorder %v1270, 0.0
          %vm1326 = vcmp.ge.f32.partialorder %v1273, 0.0
          %vm1327 = vcmp.ge.f32.partialorder %v1275, 0.0
          %vm1328 = vcmp.ge.f32.partialorder %v1278, 0.0
          %vm1329 = vcmp.ge.f32.partialorder %v1280, 0.0
          %v1330 = vmul.f32 %v1163, 0.01
          %v1331 = vmul.f32 %v1165, 0.01
          %v1332 = vmul.f32 %v1168, 0.01
          %v1333 = vmul.f32 %v1170, 0.01
          %v1334 = vmul.f32 %v1173, 0.01
          %v1335 = vmul.f32 %v1175, 0.01
          %v1336 = vmul.f32 %v1178, 0.01
          %v1337 = vmul.f32 %v1180, 0.01
          %v1338 = vmul.f32 %v1183, 0.01
          %v1339 = vmul.f32 %v1185, 0.01
          %v1340 = vmul.f32 %v1188, 0.01
          %v1341 = vmul.f32 %v1190, 0.01
          %v1342 = vmul.f32 %v1193, 0.01
          %v1343 = vmul.f32 %v1195, 0.01
          %v1344 = vmul.f32 %v1198, 0.01
          %v1345 = vmul.f32 %v1200, 0.01
          %v1346 = vmul.f32 %v1203, 0.01
          %v1347 = vmul.f32 %v1205, 0.01
          %v1348 = vmul.f32 %v1208, 0.01
          %v1349 = vmul.f32 %v1210, 0.01
          %v1350 = vmul.f32 %v1213, 0.01
          %v1351 = vmul.f32 %v1215, 0.01
          %v1352 = vmul.f32 %v1218, 0.01
          %v1353 = vmul.f32 %v1220, 0.01
          %v1354 = vmul.f32 %v1223, 0.01
          %v1355 = vmul.f32 %v1225, 0.01
          %v1356 = vmul.f32 %v1228, 0.01
          %v1357 = vmul.f32 %v1230, 0.01
          %v1358 = vmul.f32 %v1233, 0.01
          %v1359 = vmul.f32 %v1235, 0.01
          %v1360 = vmul.f32 %v1238, 0.01
          %v1361 = vmul.f32 %v1240, 0.01
          %v1362 = vmul.f32 %v1243, 0.01
          %v1363 = vmul.f32 %v1245, 0.01
          %v1364 = vmul.f32 %v1248, 0.01
          %v1365 = vmul.f32 %v1250, 0.01
          %v1366 = vmul.f32 %v1253, 0.01
          %v1367 = vmul.f32 %v1255, 0.01
          %v1368 = vmul.f32 %v1258, 0.01
          %v1369 = vmul.f32 %v1260, 0.01
          %v1370 = vmul.f32 %v1263, 0.01
          %v1371 = vmul.f32 %v1265, 0.01
          %v1372 = vmul.f32 %v1268, 0.01
          %v1373 = vmul.f32 %v1270, 0.01
          %v1374 = vmul.f32 %v1273, 0.01
          %v1375 = vmul.f32 %v1275, 0.01
          %v1376 = vmul.f32 %v1278, 0.01
          %v1377 = vmul.f32 %v1280, 0.01
          %v1378 = vsel %vm1282, %v1163, %v1330
          %v1379 = vsel %vm1283, %v1165, %v1331
          %v1380 = vsel %vm1284, %v1168, %v1332
          %v1381 = vsel %vm1285, %v1170, %v1333
          %v1382 = vsel %vm1286, %v1173, %v1334
          %v1383 = vsel %vm1287, %v1175, %v1335
          %v1384 = vsel %vm1288, %v1178, %v1336
          %v1385 = vsel %vm1289, %v1180, %v1337
          %v1386 = vsel %vm1290, %v1183, %v1338
          %v1387 = vsel %vm1291, %v1185, %v1339
          %v1388 = vsel %vm1292, %v1188, %v1340
          %v1389 = vsel %vm1293, %v1190, %v1341
          %v1390 = vsel %vm1294, %v1193, %v1342
          %v1391 = vsel %vm1295, %v1195, %v1343
          %v1392 = vsel %vm1296, %v1198, %v1344
          %v1393 = vsel %vm1297, %v1200, %v1345
          %v1394 = vsel %vm1298, %v1203, %v1346
          %v1395 = vsel %vm1299, %v1205, %v1347
          %v1396 = vsel %vm1300, %v1208, %v1348
          %v1397 = vsel %vm1301, %v1210, %v1349
          %v1398 = vsel %vm1302, %v1213, %v1350
          %v1399 = vsel %vm1303, %v1215, %v1351
          %v1400 = vsel %vm1304, %v1218, %v1352
          %v1401 = vsel %vm1305, %v1220, %v1353
          %v1402 = vsel %vm1306, %v1223, %v1354
          %v1403 = vsel %vm1307, %v1225, %v1355
          %v1404 = vsel %vm1308, %v1228, %v1356
          %v1405 = vsel %vm1309, %v1230, %v1357
          %v1406 = vsel %vm1310, %v1233, %v1358
          %v1407 = vsel %vm1311, %v1235, %v1359
          %v1408 = vsel %vm1312, %v1238, %v1360
          %v1409 = vsel %vm1313, %v1240, %v1361
          %v1410 = vsel %vm1314, %v1243, %v1362
          %v1411 = vsel %vm1315, %v1245, %v1363
          %v1412 = vsel %vm1316, %v1248, %v1364
          %v1413 = vsel %vm1317, %v1250, %v1365
          %v1414 = vsel %vm1318, %v1253, %v1366
          %v1415 = vsel %vm1319, %v1255, %v1367
          %v1416 = vsel %vm1320, %v1258, %v1368
          %v1417 = vsel %vm1321, %v1260, %v1369
          %v1418 = vsel %vm1322, %v1263, %v1370
          %v1419 = vsel %vm1323, %v1265, %v1371
          %v1420 = vsel %vm1324, %v1268, %v1372
          %v1421 = vsel %vm1325, %v1270, %v1373
          %v1422 = vsel %vm1326, %v1273, %v1374
          %v1423 = vsel %vm1327, %v1275, %v1375
          %v1424 = vsel %vm1328, %v1278, %v1376
          %v1425 = vsel %vm1329, %v1280, %v1377
          %v1426 = vpack.c.bf16 %v1379, %v1378
          %v1427 = vpack.c.bf16 %v1381, %v1380
          %v1428 = vpack.c.bf16 %v1383, %v1382
          %v1429 = vpack.c.bf16 %v1385, %v1384
          %v1430 = vpack.c.bf16 %v1387, %v1386
          %v1431 = vpack.c.bf16 %v1389, %v1388
          %v1432 = vpack.c.bf16 %v1391, %v1390
          %v1433 = vpack.c.bf16 %v1393, %v1392
          %v1434 = vpack.c.bf16 %v1395, %v1394
          %v1435 = vpack.c.bf16 %v1397, %v1396
          %v1436 = vpack.c.bf16 %v1399, %v1398
          %v1437 = vpack.c.bf16 %v1401, %v1400
          %v1438 = vpack.c.bf16 %v1403, %v1402
          %v1439 = vpack.c.bf16 %v1405, %v1404
          %v1440 = vpack.c.bf16 %v1407, %v1406
          %v1441 = vpack.c.bf16 %v1409, %v1408
          %v1442 = vpack.c.bf16 %v1411, %v1410
          %v1443 = vpack.c.bf16 %v1413, %v1412
          %v1444 = vpack.c.bf16 %v1415, %v1414
          %v1445 = vpack.c.bf16 %v1417, %v1416
          %v1446 = vpack.c.bf16 %v1419, %v1418
          %v1447 = vpack.c.bf16 %v1421, %v1420
          %v1448 = vpack.c.bf16 %v1423, %v1422
          %v1449 = vpack.c.bf16 %v1425, %v1424
          %v1450 = vld [vmem:[%s2] sm:$0xf]
          %v1451 = vld [vmem:[%s2 + $0x4] sm:$0xf]
          %v1452 = vld [vmem:[%s2 + $0x8] sm:$0xf]
          %v1453 = vld [vmem:[%s2 + $0xc] sm:$0xf]
          %v1454 = vld [vmem:[%s2 + $0x10] sm:$0xf]
          %v1455 = vld [vmem:[%s2 + $0x14] sm:$0xf]
          %v1456 = vld [vmem:[%s2 + $0x18] sm:$0xf]
          %v1457 = vld [vmem:[%s2 + $0x1c] sm:$0xf]
          %v1458 = vld [vmem:[%s2 + $0x20] sm:$0xf]
          %v1459 = vld [vmem:[%s2 + $0x24] sm:$0xf]
          %v1460 = vld [vmem:[%s2 + $0x28] sm:$0xf]
          %v1461 = vld [vmem:[%s2 + $0x2c] sm:$0xf]
          %v1462 = vld [vmem:[%s2 + $0x30] sm:$0xf]
          %v1463 = vld [vmem:[%s2 + $0x34] sm:$0xf]
          %v1464 = vld [vmem:[%s2 + $0x38] sm:$0xf]
          %v1465 = vld [vmem:[%s2 + $0x3c] sm:$0xf]
          %v1466 = vld [vmem:[%s3] sm:$0x1]
          %v1468 = vperm.slane %v1466, 0
          %v1486 = vunpack.c.l.b16 %v1450
          %v1487 = vunpack.c.l.b16 %v1451
          %v1488 = vunpack.c.l.b16 %v1452
          %v1489 = vunpack.c.l.b16 %v1453
          %v1490 = vunpack.c.l.b16 %v1454
          %v1491 = vunpack.c.l.b16 %v1455
          %v1492 = vunpack.c.l.b16 %v1456
          %v1493 = vunpack.c.l.b16 %v1457
          %v1494 = vunpack.c.l.b16 %v1458
          %v1495 = vunpack.c.l.b16 %v1459
          %v1496 = vunpack.c.l.b16 %v1460
          %v1497 = vunpack.c.l.b16 %v1461
          %v1498 = vunpack.c.l.b16 %v1462
          %v1499 = vunpack.c.l.b16 %v1463
          %v1500 = vunpack.c.l.b16 %v1464
          %v1501 = vunpack.c.l.b16 %v1465
          %v1502 = vpack.c.b16 %v1487, %v1486
          %v1503 = vpack.c.b16 %v1489, %v1488
          %v1504 = vpack.c.b16 %v1491, %v1490
          %v1505 = vpack.c.b16 %v1493, %v1492
          %v1506 = vpack.c.b16 %v1495, %v1494
          %v1507 = vpack.c.b16 %v1497, %v1496
          %v1508 = vpack.c.b16 %v1499, %v1498
          %v1509 = vpack.c.b16 %v1501, %v1500
          %1518 = vmatpush.bf16.msra.mxu0 %v1509
          %1519 = vmatpush.bf16.msra.mxu0 %v1508
          %1520 = vmatpush.bf16.msra.mxu0 %v1507
          %1521 = vmatpush.bf16.msra.mxu0 %v1506
          %1522 = vmatpush.bf16.msra.mxu0 %v1505
          %1523 = vmatpush.bf16.msra.mxu0 %v1504
          %1524 = vmatpush.bf16.msra.mxu0 %v1503
          %1525 = vmatpush.bf16.msra.mxu0 %v1502
          %1526 = vmatmul.bf16.gmra.mxu0 %v1426
          %v1527 = vpop.f32.mrf.mxu0
          %v1528 = vadd.f32 %v1468, %v1527
          %v1529 = vpop.f32.mrf.mxu0
          %v1530 = vadd.f32 %v1468, %v1529
          %1531 = vmatmul.bf16.gmra.mxu0 %v1427
          %v1532 = vpop.f32.mrf.mxu0
          %v1533 = vadd.f32 %v1468, %v1532
          %v1534 = vpop.f32.mrf.mxu0
          %v1535 = vadd.f32 %v1468, %v1534
          %1536 = vmatmul.bf16.gmra.mxu0 %v1428
          %v1537 = vpop.f32.mrf.mxu0
          %v1538 = vadd.f32 %v1468, %v1537
          %v1539 = vpop.f32.mrf.mxu0
          %v1540 = vadd.f32 %v1468, %v1539
          %1541 = vmatmul.bf16.gmra.mxu0 %v1429
          %v1542 = vpop.f32.mrf.mxu0
          %v1543 = vadd.f32 %v1468, %v1542
          %v1544 = vpop.f32.mrf.mxu0
          %v1545 = vadd.f32 %v1468, %v1544
          %1546 = vmatmul.bf16.gmra.mxu0 %v1430
          %v1547 = vpop.f32.mrf.mxu0
          %v1548 = vadd.f32 %v1468, %v1547
          %v1549 = vpop.f32.mrf.mxu0
          %v1550 = vadd.f32 %v1468, %v1549
          %1551 = vmatmul.bf16.gmra.mxu0 %v1431
          %v1552 = vpop.f32.mrf.mxu0
          %v1553 = vadd.f32 %v1468, %v1552
          %v1554 = vpop.f32.mrf.mxu0
          %v1555 = vadd.f32 %v1468, %v1554
          %1556 = vmatmul.bf16.gmra.mxu0 %v1432
          %v1557 = vpop.f32.mrf.mxu0
          %v1558 = vadd.f32 %v1468, %v1557
          %v1559 = vpop.f32.mrf.mxu0
          %v1560 = vadd.f32 %v1468, %v1559
          %1561 = vmatmul.bf16.gmra.mxu0 %v1433
          %v1562 = vpop.f32.mrf.mxu0
          %v1563 = vadd.f32 %v1468, %v1562
          %v1564 = vpop.f32.mrf.mxu0
          %v1565 = vadd.f32 %v1468, %v1564
          %1566 = vmatmul.bf16.gmra.mxu0 %v1434
          %v1567 = vpop.f32.mrf.mxu0
          %v1568 = vadd.f32 %v1468, %v1567
          %v1569 = vpop.f32.mrf.mxu0
          %v1570 = vadd.f32 %v1468, %v1569
          %1571 = vmatmul.bf16.gmra.mxu0 %v1435
          %v1572 = vpop.f32.mrf.mxu0
          %v1573 = vadd.f32 %v1468, %v1572
          %v1574 = vpop.f32.mrf.mxu0
          %v1575 = vadd.f32 %v1468, %v1574
          %1576 = vmatmul.bf16.gmra.mxu0 %v1436
          %v1577 = vpop.f32.mrf.mxu0
          %v1578 = vadd.f32 %v1468, %v1577
          %v1579 = vpop.f32.mrf.mxu0
          %v1580 = vadd.f32 %v1468, %v1579
          %1581 = vmatmul.bf16.gmra.mxu0 %v1437
          %v1582 = vpop.f32.mrf.mxu0
          %v1583 = vadd.f32 %v1468, %v1582
          %v1584 = vpop.f32.mrf.mxu0
          %v1585 = vadd.f32 %v1468, %v1584
          %1586 = vmatmul.bf16.gmra.mxu0 %v1438
          %v1587 = vpop.f32.mrf.mxu0
          %v1588 = vadd.f32 %v1468, %v1587
          %v1589 = vpop.f32.mrf.mxu0
          %v1590 = vadd.f32 %v1468, %v1589
          %1591 = vmatmul.bf16.gmra.mxu0 %v1439
          %v1592 = vpop.f32.mrf.mxu0
          %v1593 = vadd.f32 %v1468, %v1592
          %v1594 = vpop.f32.mrf.mxu0
          %v1595 = vadd.f32 %v1468, %v1594
          %1596 = vmatmul.bf16.gmra.mxu0 %v1440
          %v1597 = vpop.f32.mrf.mxu0
          %v1598 = vadd.f32 %v1468, %v1597
          %v1599 = vpop.f32.mrf.mxu0
          %v1600 = vadd.f32 %v1468, %v1599
          %1601 = vmatmul.bf16.gmra.mxu0 %v1441
          %v1602 = vpop.f32.mrf.mxu0
          %v1603 = vadd.f32 %v1468, %v1602
          %v1604 = vpop.f32.mrf.mxu0
          %v1605 = vadd.f32 %v1468, %v1604
          %1606 = vmatmul.bf16.gmra.mxu0 %v1442
          %v1607 = vpop.f32.mrf.mxu0
          %v1608 = vadd.f32 %v1468, %v1607
          %v1609 = vpop.f32.mrf.mxu0
          %v1610 = vadd.f32 %v1468, %v1609
          %1611 = vmatmul.bf16.gmra.mxu0 %v1443
          %v1612 = vpop.f32.mrf.mxu0
          %v1613 = vadd.f32 %v1468, %v1612
          %v1614 = vpop.f32.mrf.mxu0
          %v1615 = vadd.f32 %v1468, %v1614
          %1616 = vmatmul.bf16.gmra.mxu0 %v1444
          %v1617 = vpop.f32.mrf.mxu0
          %v1618 = vadd.f32 %v1468, %v1617
          %v1619 = vpop.f32.mrf.mxu0
          %v1620 = vadd.f32 %v1468, %v1619
          %1621 = vmatmul.bf16.gmra.mxu0 %v1445
          %v1622 = vpop.f32.mrf.mxu0
          %v1623 = vadd.f32 %v1468, %v1622
          %v1624 = vpop.f32.mrf.mxu0
          %v1625 = vadd.f32 %v1468, %v1624
          %1626 = vmatmul.bf16.gmra.mxu0 %v1446
          %v1627 = vpop.f32.mrf.mxu0
          %v1628 = vadd.f32 %v1468, %v1627
          %v1629 = vpop.f32.mrf.mxu0
          %v1630 = vadd.f32 %v1468, %v1629
          %1631 = vmatmul.bf16.gmra.mxu0 %v1447
          %v1632 = vpop.f32.mrf.mxu0
          %v1633 = vadd.f32 %v1468, %v1632
          %v1634 = vpop.f32.mrf.mxu0
          %v1635 = vadd.f32 %v1468, %v1634
          %1636 = vmatmul.bf16.gmra.mxu0 %v1448
          %v1637 = vpop.f32.mrf.mxu0
          %v1638 = vadd.f32 %v1468, %v1637
          %v1639 = vpop.f32.mrf.mxu0
          %v1640 = vadd.f32 %v1468, %v1639
          %1641 = vmatmul.bf16.gmra.mxu0 %v1449
          %v1642 = vpop.f32.mrf.mxu0
          %v1643 = vadd.f32 %v1468, %v1642
          %v1644 = vpop.f32.mrf.mxu0
          %v1645 = vadd.f32 %v1468, %v1644
          %1646 = vdwg.mxu0
          %v1647 = vpack.c.bf16 %v1528, %v1528
          %v1648 = vpack.c.bf16 %v1530, %v1530
          %v1649 = vpack.c.bf16 %v1533, %v1533
          %v1650 = vpack.c.bf16 %v1535, %v1535
          %v1651 = vpack.c.bf16 %v1538, %v1538
          %v1652 = vpack.c.bf16 %v1540, %v1540
          %v1653 = vpack.c.bf16 %v1543, %v1543
          %v1654 = vpack.c.bf16 %v1545, %v1545
          %v1655 = vpack.c.bf16 %v1548, %v1548
          %v1656 = vpack.c.bf16 %v1550, %v1550
          %v1657 = vpack.c.bf16 %v1553, %v1553
          %v1658 = vpack.c.bf16 %v1555, %v1555
          %v1659 = vpack.c.bf16 %v1558, %v1558
          %v1660 = vpack.c.bf16 %v1560, %v1560
          %v1661 = vpack.c.bf16 %v1563, %v1563
          %v1662 = vpack.c.bf16 %v1565, %v1565
          %v1663 = vpack.c.bf16 %v1568, %v1568
          %v1664 = vpack.c.bf16 %v1570, %v1570
          %v1665 = vpack.c.bf16 %v1573, %v1573
          %v1666 = vpack.c.bf16 %v1575, %v1575
          %v1667 = vpack.c.bf16 %v1578, %v1578
          %v1668 = vpack.c.bf16 %v1580, %v1580
          %v1669 = vpack.c.bf16 %v1583, %v1583
          %v1670 = vpack.c.bf16 %v1585, %v1585
          %v1671 = vpack.c.bf16 %v1588, %v1588
          %v1672 = vpack.c.bf16 %v1590, %v1590
          %v1673 = vpack.c.bf16 %v1593, %v1593
          %v1674 = vpack.c.bf16 %v1595, %v1595
          %v1675 = vpack.c.bf16 %v1598, %v1598
          %v1676 = vpack.c.bf16 %v1600, %v1600
          %v1677 = vpack.c.bf16 %v1603, %v1603
          %v1678 = vpack.c.bf16 %v1605, %v1605
          %v1679 = vpack.c.bf16 %v1608, %v1608
          %v1680 = vpack.c.bf16 %v1610, %v1610
          %v1681 = vpack.c.bf16 %v1613, %v1613
          %v1682 = vpack.c.bf16 %v1615, %v1615
          %v1683 = vpack.c.bf16 %v1618, %v1618
          %v1684 = vpack.c.bf16 %v1620, %v1620
          %v1685 = vpack.c.bf16 %v1623, %v1623
          %v1686 = vpack.c.bf16 %v1625, %v1625
          %v1687 = vpack.c.bf16 %v1628, %v1628
          %v1688 = vpack.c.bf16 %v1630, %v1630
          %v1689 = vpack.c.bf16 %v1633, %v1633
          %v1690 = vpack.c.bf16 %v1635, %v1635
          %v1691 = vpack.c.bf16 %v1638, %v1638
          %v1692 = vpack.c.bf16 %v1640, %v1640
          %v1693 = vpack.c.bf16 %v1643, %v1643
          %v1694 = vpack.c.bf16 %v1645, %v1645
          %s1695 = sshra.s32 %s218, 3
          %s1696 = sand.u32 %s218, 7
          %s1697 = smul.addr %s1695, 4
          %s1698 = scalar_lea.vmem [#allocation2], %s1697
          %1699 = vst [vmem:[%s1698] sm:$0xf] %v1647
          %1700 = vst [vmem:[%s1698 + $0x4] sm:$0xf] %v1648
          %1701 = vst [vmem:[%s1698 + $0x8] sm:$0xf] %v1649
          %1702 = vst [vmem:[%s1698 + $0xc] sm:$0xf] %v1650
          %1703 = vst [vmem:[%s1698 + $0x10] sm:$0xf] %v1651
          %1704 = vst [vmem:[%s1698 + $0x14] sm:$0xf] %v1652
          %1705 = vst [vmem:[%s1698 + $0x18] sm:$0xf] %v1653
          %1706 = vst [vmem:[%s1698 + $0x1c] sm:$0xf] %v1654
          %1707 = vst [vmem:[%s1698 + $0x20] sm:$0xf] %v1655
          %1708 = vst [vmem:[%s1698 + $0x24] sm:$0xf] %v1656
          %1709 = vst [vmem:[%s1698 + $0x28] sm:$0xf] %v1657
          %1710 = vst [vmem:[%s1698 + $0x2c] sm:$0xf] %v1658
          %1711 = vst [vmem:[%s1698 + $0x30] sm:$0xf] %v1659
          %1712 = vst [vmem:[%s1698 + $0x34] sm:$0xf] %v1660
          %1713 = vst [vmem:[%s1698 + $0x38] sm:$0xf] %v1661
          %1714 = vst [vmem:[%s1698 + $0x3c] sm:$0xf] %v1662
          %1715 = vst [vmem:[%s1698 + $0x40] sm:$0xf] %v1663
          %1716 = vst [vmem:[%s1698 + $0x44] sm:$0xf] %v1664
          %1717 = vst [vmem:[%s1698 + $0x48] sm:$0xf] %v1665
          %1718 = vst [vmem:[%s1698 + $0x4c] sm:$0xf] %v1666
          %1719 = vst [vmem:[%s1698 + $0x50] sm:$0xf] %v1667
          %1720 = vst [vmem:[%s1698 + $0x54] sm:$0xf] %v1668
          %1721 = vst [vmem:[%s1698 + $0x58] sm:$0xf] %v1669
          %1722 = vst [vmem:[%s1698 + $0x5c] sm:$0xf] %v1670
          %1723 = vst [vmem:[%s1698 + $0x60] sm:$0xf] %v1671
          %1724 = vst [vmem:[%s1698 + $0x64] sm:$0xf] %v1672
          %1725 = vst [vmem:[%s1698 + $0x68] sm:$0xf] %v1673
          %1726 = vst [vmem:[%s1698 + $0x6c] sm:$0xf] %v1674
          %1727 = vst [vmem:[%s1698 + $0x70] sm:$0xf] %v1675
          %1728 = vst [vmem:[%s1698 + $0x74] sm:$0xf] %v1676
          %1729 = vst [vmem:[%s1698 + $0x78] sm:$0xf] %v1677
          %1730 = vst [vmem:[%s1698 + $0x7c] sm:$0xf] %v1678
          %1731 = vst [vmem:[%s1698 + $0x80] sm:$0xf] %v1679
          %1732 = vst [vmem:[%s1698 + $0x84] sm:$0xf] %v1680
          %1733 = vst [vmem:[%s1698 + $0x88] sm:$0xf] %v1681
          %1734 = vst [vmem:[%s1698 + $0x8c] sm:$0xf] %v1682
          %1735 = vst [vmem:[%s1698 + $0x90] sm:$0xf] %v1683
          %1736 = vst [vmem:[%s1698 + $0x94] sm:$0xf] %v1684
          %1737 = vst [vmem:[%s1698 + $0x98] sm:$0xf] %v1685
          %1738 = vst [vmem:[%s1698 + $0x9c] sm:$0xf] %v1686
          %1739 = vst [vmem:[%s1698 + $0xa0] sm:$0xf] %v1687
          %1740 = vst [vmem:[%s1698 + $0xa4] sm:$0xf] %v1688
          %1741 = vst [vmem:[%s1698 + $0xa8] sm:$0xf] %v1689
          %1742 = vst [vmem:[%s1698 + $0xac] sm:$0xf] %v1690
          %1743 = vst [vmem:[%s1698 + $0xb0] sm:$0xf] %v1691
          %1744 = vst [vmem:[%s1698 + $0xb4] sm:$0xf] %v1692
          %1745 = vst [vmem:[%s1698 + $0xb8] sm:$0xf] %v1693
          %1746 = vst [vmem:[%s1698 + $0xbc] sm:$0xf] %v1694
          %1747 = vst [vmem:[%s216] sm:$0xff] %v1528
          %1748 = vst [vmem:[%s216 + $0x8] sm:$0xff] %v1530
          %1749 = vst [vmem:[%s216 + $0x10] sm:$0xff] %v1533
          %1750 = vst [vmem:[%s216 + $0x18] sm:$0xff] %v1535
          %1751 = vst [vmem:[%s216 + $0x20] sm:$0xff] %v1538
          %1752 = vst [vmem:[%s216 + $0x28] sm:$0xff] %v1540
          %1753 = vst [vmem:[%s216 + $0x30] sm:$0xff] %v1543
          %1754 = vst [vmem:[%s216 + $0x38] sm:$0xff] %v1545
          %1755 = vst [vmem:[%s216 + $0x40] sm:$0xff] %v1548
          %1756 = vst [vmem:[%s216 + $0x48] sm:$0xff] %v1550
          %1757 = vst [vmem:[%s216 + $0x50] sm:$0xff] %v1553
          %1758 = vst [vmem:[%s216 + $0x58] sm:$0xff] %v1555
          %1759 = vst [vmem:[%s216 + $0x60] sm:$0xff] %v1558
          %1760 = vst [vmem:[%s216 + $0x68] sm:$0xff] %v1560
          %1761 = vst [vmem:[%s216 + $0x70] sm:$0xff] %v1563
          %1762 = vst [vmem:[%s216 + $0x78] sm:$0xff] %v1565
          %1763 = vst [vmem:[%s216 + $0x80] sm:$0xff] %v1568
          %1764 = vst [vmem:[%s216 + $0x88] sm:$0xff] %v1570
          %1765 = vst [vmem:[%s216 + $0x90] sm:$0xff] %v1573
          %1766 = vst [vmem:[%s216 + $0x98] sm:$0xff] %v1575
          %1767 = vst [vmem:[%s216 + $0xa0] sm:$0xff] %v1578
          %1768 = vst [vmem:[%s216 + $0xa8] sm:$0xff] %v1580
          %1769 = vst [vmem:[%s216 + $0xb0] sm:$0xff] %v1583
          %1770 = vst [vmem:[%s216 + $0xb8] sm:$0xff] %v1585
          %1771 = vst [vmem:[%s216 + $0xc0] sm:$0xff] %v1588
          %1772 = vst [vmem:[%s216 + $0xc8] sm:$0xff] %v1590
          %1773 = vst [vmem:[%s216 + $0xd0] sm:$0xff] %v1593
          %1774 = vst [vmem:[%s216 + $0xd8] sm:$0xff] %v1595
          %1775 = vst [vmem:[%s216 + $0xe0] sm:$0xff] %v1598
          %1776 = vst [vmem:[%s216 + $0xe8] sm:$0xff] %v1600
          %1777 = vst [vmem:[%s216 + $0xf0] sm:$0xff] %v1603
          %1778 = vst [vmem:[%s216 + $0xf8] sm:$0xff] %v1605
          %1779 = vst [vmem:[%s216 + $0x100] sm:$0xff] %v1608
          %1780 = vst [vmem:[%s216 + $0x108] sm:$0xff] %v1610
          %1781 = vst [vmem:[%s216 + $0x110] sm:$0xff] %v1613
          %1782 = vst [vmem:[%s216 + $0x118] sm:$0xff] %v1615
          %1783 = vst [vmem:[%s216 + $0x120] sm:$0xff] %v1618
          %1784 = vst [vmem:[%s216 + $0x128] sm:$0xff] %v1620
          %1785 = vst [vmem:[%s216 + $0x130] sm:$0xff] %v1623
          %1786 = vst [vmem:[%s216 + $0x138] sm:$0xff] %v1625
          %1787 = vst [vmem:[%s216 + $0x140] sm:$0xff] %v1628
          %1788 = vst [vmem:[%s216 + $0x148] sm:$0xff] %v1630
          %1789 = vst [vmem:[%s216 + $0x150] sm:$0xff] %v1633
          %1790 = vst [vmem:[%s216 + $0x158] sm:$0xff] %v1635
          %1791 = vst [vmem:[%s216 + $0x160] sm:$0xff] %v1638
          %1792 = vst [vmem:[%s216 + $0x168] sm:$0xff] %v1640
          %1793 = vst [vmem:[%s216 + $0x170] sm:$0xff] %v1643
          %1794 = vst [vmem:[%s216 + $0x178] sm:$0xff] %v1645
        $region44: #{_gcn_forward_jit.1} parent=35 // pred_fallthru
          _
        %p1795 = scmp.eq.s32.totalorder %s20, 1
        // Predicated region
        $region45: #{_gcn_forward_jit.1} parent=35 // pred_check
          %p1796 = pneg %p1795
        $region46: #{_gcn_forward_jit.1} parent=35 // pred_check_branch
          %1798 = sbr.rel (%p1796) target = $region48
        $region47: #{_gcn_forward_jit.1} parent=35 // pred_region
          %v1799 = vld [vmem:[#allocation3] sm:$0xff]
          %v1800 = vld [vmem:[#allocation3 + $0x8] sm:$0xf]
          %v1801 = vld [vmem:[#allocation3 + $0xc] sm:$0xff]
          %v1802 = vld [vmem:[#allocation3 + $0x14] sm:$0xf]
          %v1803 = vld [vmem:[#allocation3 + $0x18] sm:$0xff]
          %v1804 = vld [vmem:[#allocation3 + $0x20] sm:$0xf]
          %v1805 = vld [vmem:[#allocation3 + $0x24] sm:$0xff]
          %v1806 = vld [vmem:[#allocation3 + $0x2c] sm:$0xf]
          %v1807 = vld [vmem:[#allocation3 + $0x30] sm:$0xff]
          %v1808 = vld [vmem:[#allocation3 + $0x38] sm:$0xf]
          %v1809 = vld [vmem:[#allocation3 + $0x3c] sm:$0xff]
          %v1810 = vld [vmem:[#allocation3 + $0x44] sm:$0xf]
          %v1811 = vld [vmem:[#allocation3 + $0x48] sm:$0xff]
          %v1812 = vld [vmem:[#allocation3 + $0x50] sm:$0xf]
          %v1813 = vld [vmem:[#allocation3 + $0x54] sm:$0xff]
          %v1814 = vld [vmem:[#allocation3 + $0x5c] sm:$0xf]
          %v1815 = vld [vmem:[#allocation3 + $0x60] sm:$0xff]
          %v1816 = vld [vmem:[#allocation3 + $0x68] sm:$0xf]
          %v1817 = vld [vmem:[#allocation3 + $0x6c] sm:$0xff]
          %v1818 = vld [vmem:[#allocation3 + $0x74] sm:$0xf]
          %v1819 = vld [vmem:[#allocation3 + $0x78] sm:$0xff]
          %v1820 = vld [vmem:[#allocation3 + $0x80] sm:$0xf]
          %v1821 = vld [vmem:[#allocation3 + $0x84] sm:$0xff]
          %v1822 = vld [vmem:[#allocation3 + $0x8c] sm:$0xf]
          %v1823 = vld [vmem:[#allocation3 + $0x90] sm:$0xff]
          %v1824 = vld [vmem:[#allocation3 + $0x98] sm:$0xf]
          %v1825 = vld [vmem:[#allocation3 + $0x9c] sm:$0xff]
          %v1826 = vld [vmem:[#allocation3 + $0xa4] sm:$0xf]
          %v1827 = vld [vmem:[#allocation3 + $0xa8] sm:$0xff]
          %v1828 = vld [vmem:[#allocation3 + $0xb0] sm:$0xf]
          %v1829 = vld [vmem:[#allocation3 + $0xb4] sm:$0xff]
          %v1830 = vld [vmem:[#allocation3 + $0xbc] sm:$0xf]
          %v1831 = vld [vmem:[#allocation3 + $0xc0] sm:$0xff]
          %v1832 = vld [vmem:[#allocation3 + $0xc8] sm:$0xf]
          %v1833 = vld [vmem:[#allocation3 + $0xcc] sm:$0xff]
          %v1834 = vld [vmem:[#allocation3 + $0xd4] sm:$0xf]
          %v1835 = vld [vmem:[#allocation3 + $0xd8] sm:$0xff]
          %v1836 = vld [vmem:[#allocation3 + $0xe0] sm:$0xf]
          %v1837 = vld [vmem:[#allocation3 + $0xe4] sm:$0xff]
          %v1838 = vld [vmem:[#allocation3 + $0xec] sm:$0xf]
          %v1839 = vld [vmem:[#allocation3 + $0xf0] sm:$0xff]
          %v1840 = vld [vmem:[#allocation3 + $0xf8] sm:$0xf]
          %v1841 = vld [vmem:[#allocation3 + $0xfc] sm:$0xff]
          %v1842 = vld [vmem:[#allocation3 + $0x104] sm:$0xf]
          %v1843 = vld [vmem:[#allocation3 + $0x108] sm:$0xff]
          %v1844 = vld [vmem:[#allocation3 + $0x110] sm:$0xf]
          %v1845 = vld [vmem:[#allocation3 + $0x114] sm:$0xff]
          %v1846 = vld [vmem:[#allocation3 + $0x11c] sm:$0xf]
          %v1847 = vld [vmem:[#allocation3 + $0x120] sm:$0xff]
          %v1848 = vld [vmem:[#allocation3 + $0x128] sm:$0xf]
          %v1849 = vld [vmem:[#allocation3 + $0x12c] sm:$0xff]
          %v1850 = vld [vmem:[#allocation3 + $0x134] sm:$0xf]
          %v1851 = vld [vmem:[#allocation3 + $0x138] sm:$0xff]
          %v1852 = vld [vmem:[#allocation3 + $0x140] sm:$0xf]
          %v1853 = vld [vmem:[#allocation3 + $0x144] sm:$0xff]
          %v1854 = vld [vmem:[#allocation3 + $0x14c] sm:$0xf]
          %v1855 = vld [vmem:[#allocation3 + $0x150] sm:$0xff]
          %v1856 = vld [vmem:[#allocation3 + $0x158] sm:$0xf]
          %v1857 = vld [vmem:[#allocation3 + $0x15c] sm:$0xff]
          %v1858 = vld [vmem:[#allocation3 + $0x164] sm:$0xf]
          %v1859 = vld [vmem:[#allocation3 + $0x168] sm:$0xff]
          %v1860 = vld [vmem:[#allocation3 + $0x170] sm:$0xf]
          %v1861 = vld [vmem:[#allocation3 + $0x174] sm:$0xff]
          %v1862 = vld [vmem:[#allocation3 + $0x17c] sm:$0xf]
          %v1863 = vld [vmem:[#allocation3 + $0x180] sm:$0xff]
          %v1864 = vld [vmem:[#allocation3 + $0x188] sm:$0xf]
          %v1865 = vld [vmem:[#allocation3 + $0x18c] sm:$0xff]
          %v1866 = vld [vmem:[#allocation3 + $0x194] sm:$0xf]
          %v1867 = vld [vmem:[#allocation3 + $0x198] sm:$0xff]
          %v1868 = vld [vmem:[#allocation3 + $0x1a0] sm:$0xf]
          %v1869 = vld [vmem:[#allocation3 + $0x1a4] sm:$0xff]
          %v1870 = vld [vmem:[#allocation3 + $0x1ac] sm:$0xf]
          %v1871 = vld [vmem:[#allocation3 + $0x1b0] sm:$0xff]
          %v1872 = vld [vmem:[#allocation3 + $0x1b8] sm:$0xf]
          %v1873 = vld [vmem:[#allocation3 + $0x1bc] sm:$0xff]
          %v1874 = vld [vmem:[#allocation3 + $0x1c4] sm:$0xf]
          %v1875 = vld [vmem:[#allocation3 + $0x1c8] sm:$0xff]
          %v1876 = vld [vmem:[#allocation3 + $0x1d0] sm:$0xf]
          %v1877 = vld [vmem:[#allocation3 + $0x1d4] sm:$0xff]
          %v1878 = vld [vmem:[#allocation3 + $0x1dc] sm:$0xf]
          %v1879 = vld [vmem:[#allocation3 + $0x1e0] sm:$0xff]
          %v1880 = vld [vmem:[#allocation3 + $0x1e8] sm:$0xf]
          %v1881 = vld [vmem:[#allocation3 + $0x1ec] sm:$0xff]
          %v1882 = vld [vmem:[#allocation3 + $0x1f4] sm:$0xf]
          %v1883 = vld [vmem:[#allocation3 + $0x1f8] sm:$0xff]
          %v1884 = vld [vmem:[#allocation3 + $0x200] sm:$0xf]
          %v1885 = vld [vmem:[#allocation3 + $0x204] sm:$0xff]
          %v1886 = vld [vmem:[#allocation3 + $0x20c] sm:$0xf]
          %v1887 = vld [vmem:[#allocation3 + $0x210] sm:$0xff]
          %v1888 = vld [vmem:[#allocation3 + $0x218] sm:$0xf]
          %v1889 = vld [vmem:[#allocation3 + $0x21c] sm:$0xff]
          %v1890 = vld [vmem:[#allocation3 + $0x224] sm:$0xf]
          %v1891 = vld [vmem:[#allocation3 + $0x228] sm:$0xff]
          %v1892 = vld [vmem:[#allocation3 + $0x230] sm:$0xf]
          %v1893 = vld [vmem:[#allocation3 + $0x234] sm:$0xff]
          %v1894 = vld [vmem:[#allocation3 + $0x23c] sm:$0xf]
          %v1895 = vld [vmem:[#allocation2] sm:$0xf]
          %v1896 = vld [vmem:[#allocation2 + $0x4] sm:$0xf]
          %v1897 = vld [vmem:[#allocation2 + $0x8] sm:$0xf]
          %v1898 = vld [vmem:[#allocation2 + $0xc] sm:$0xf]
          %v1899 = vld [vmem:[#allocation2 + $0x10] sm:$0xf]
          %v1900 = vld [vmem:[#allocation2 + $0x14] sm:$0xf]
          %v1901 = vld [vmem:[#allocation2 + $0x18] sm:$0xf]
          %v1902 = vld [vmem:[#allocation2 + $0x1c] sm:$0xf]
          %v1903 = vld [vmem:[#allocation2 + $0x20] sm:$0xf]
          %v1904 = vld [vmem:[#allocation2 + $0x24] sm:$0xf]
          %v1905 = vld [vmem:[#allocation2 + $0x28] sm:$0xf]
          %v1906 = vld [vmem:[#allocation2 + $0x2c] sm:$0xf]
          %v1907 = vld [vmem:[#allocation2 + $0x30] sm:$0xf]
          %v1908 = vld [vmem:[#allocation2 + $0x34] sm:$0xf]
          %v1909 = vld [vmem:[#allocation2 + $0x38] sm:$0xf]
          %v1910 = vld [vmem:[#allocation2 + $0x3c] sm:$0xf]
          %v1911 = vld [vmem:[#allocation2 + $0x40] sm:$0xf]
          %v1912 = vld [vmem:[#allocation2 + $0x44] sm:$0xf]
          %v1913 = vld [vmem:[#allocation2 + $0x48] sm:$0xf]
          %v1914 = vld [vmem:[#allocation2 + $0x4c] sm:$0xf]
          %v1915 = vld [vmem:[#allocation2 + $0x50] sm:$0xf]
          %v1916 = vld [vmem:[#allocation2 + $0x54] sm:$0xf]
          %v1917 = vld [vmem:[#allocation2 + $0x58] sm:$0xf]
          %v1918 = vld [vmem:[#allocation2 + $0x5c] sm:$0xf]
          %v1919 = vld [vmem:[#allocation2 + $0x60] sm:$0xf]
          %v1920 = vld [vmem:[#allocation2 + $0x64] sm:$0xf]
          %v1921 = vld [vmem:[#allocation2 + $0x68] sm:$0xf]
          %v1922 = vld [vmem:[#allocation2 + $0x6c] sm:$0xf]
          %v1923 = vld [vmem:[#allocation2 + $0x70] sm:$0xf]
          %v1924 = vld [vmem:[#allocation2 + $0x74] sm:$0xf]
          %v1925 = vld [vmem:[#allocation2 + $0x78] sm:$0xf]
          %v1926 = vld [vmem:[#allocation2 + $0x7c] sm:$0xf]
          %v1927 = vld [vmem:[#allocation2 + $0x80] sm:$0xf]
          %v1928 = vld [vmem:[#allocation2 + $0x84] sm:$0xf]
          %v1929 = vld [vmem:[#allocation2 + $0x88] sm:$0xf]
          %v1930 = vld [vmem:[#allocation2 + $0x8c] sm:$0xf]
          %v1931 = vld [vmem:[#allocation2 + $0x90] sm:$0xf]
          %v1932 = vld [vmem:[#allocation2 + $0x94] sm:$0xf]
          %v1933 = vld [vmem:[#allocation2 + $0x98] sm:$0xf]
          %v1934 = vld [vmem:[#allocation2 + $0x9c] sm:$0xf]
          %v1935 = vld [vmem:[#allocation2 + $0xa0] sm:$0xf]
          %v1936 = vld [vmem:[#allocation2 + $0xa4] sm:$0xf]
          %v1937 = vld [vmem:[#allocation2 + $0xa8] sm:$0xf]
          %v1938 = vld [vmem:[#allocation2 + $0xac] sm:$0xf]
          %v1939 = vld [vmem:[#allocation2 + $0xb0] sm:$0xf]
          %v1940 = vld [vmem:[#allocation2 + $0xb4] sm:$0xf]
          %v1941 = vld [vmem:[#allocation2 + $0xb8] sm:$0xf]
          %v1942 = vld [vmem:[#allocation2 + $0xbc] sm:$0xf]
          %v2039 = vunpack.c.l.b16 %v1799
          %v2040 = vunpack.c.h.b16 %v1799
          %v2041 = vunpack.c.l.b16 %v1800
          %v2042 = vunpack.c.l.b16 %v1801
          %v2043 = vunpack.c.h.b16 %v1801
          %v2044 = vunpack.c.l.b16 %v1802
          %v2045 = vunpack.c.l.b16 %v1803
          %v2046 = vunpack.c.h.b16 %v1803
          %v2047 = vunpack.c.l.b16 %v1804
          %v2048 = vunpack.c.l.b16 %v1805
          %v2049 = vunpack.c.h.b16 %v1805
          %v2050 = vunpack.c.l.b16 %v1806
          %v2051 = vunpack.c.l.b16 %v1807
          %v2052 = vunpack.c.h.b16 %v1807
          %v2053 = vunpack.c.l.b16 %v1808
          %v2054 = vunpack.c.l.b16 %v1809
          %v2055 = vunpack.c.h.b16 %v1809
          %v2056 = vunpack.c.l.b16 %v1810
          %v2057 = vunpack.c.l.b16 %v1811
          %v2058 = vunpack.c.h.b16 %v1811
          %v2059 = vunpack.c.l.b16 %v1812
          %v2060 = vunpack.c.l.b16 %v1813
          %v2061 = vunpack.c.h.b16 %v1813
          %v2062 = vunpack.c.l.b16 %v1814
          %v2063 = vunpack.c.l.b16 %v1815
          %v2064 = vunpack.c.h.b16 %v1815
          %v2065 = vunpack.c.l.b16 %v1816
          %v2066 = vunpack.c.l.b16 %v1817
          %v2067 = vunpack.c.h.b16 %v1817
          %v2068 = vunpack.c.l.b16 %v1818
          %v2069 = vunpack.c.l.b16 %v1819
          %v2070 = vunpack.c.h.b16 %v1819
          %v2071 = vunpack.c.l.b16 %v1820
          %v2072 = vunpack.c.l.b16 %v1821
          %v2073 = vunpack.c.h.b16 %v1821
          %v2074 = vunpack.c.l.b16 %v1822
          %v2075 = vunpack.c.l.b16 %v1823
          %v2076 = vunpack.c.h.b16 %v1823
          %v2077 = vunpack.c.l.b16 %v1824
          %v2078 = vunpack.c.l.b16 %v1825
          %v2079 = vunpack.c.h.b16 %v1825
          %v2080 = vunpack.c.l.b16 %v1826
          %v2081 = vunpack.c.l.b16 %v1827
          %v2082 = vunpack.c.h.b16 %v1827
          %v2083 = vunpack.c.l.b16 %v1828
          %v2084 = vunpack.c.l.b16 %v1829
          %v2085 = vunpack.c.h.b16 %v1829
          %v2086 = vunpack.c.l.b16 %v1830
          %v2087 = vunpack.c.l.b16 %v1831
          %v2088 = vunpack.c.h.b16 %v1831
          %v2089 = vunpack.c.l.b16 %v1832
          %v2090 = vunpack.c.l.b16 %v1833
          %v2091 = vunpack.c.h.b16 %v1833
          %v2092 = vunpack.c.l.b16 %v1834
          %v2093 = vunpack.c.l.b16 %v1835
          %v2094 = vunpack.c.h.b16 %v1835
          %v2095 = vunpack.c.l.b16 %v1836
          %v2096 = vunpack.c.l.b16 %v1837
          %v2097 = vunpack.c.h.b16 %v1837
          %v2098 = vunpack.c.l.b16 %v1838
          %v2099 = vunpack.c.l.b16 %v1839
          %v2100 = vunpack.c.h.b16 %v1839
          %v2101 = vunpack.c.l.b16 %v1840
          %v2102 = vunpack.c.l.b16 %v1841
          %v2103 = vunpack.c.h.b16 %v1841
          %v2104 = vunpack.c.l.b16 %v1842
          %v2105 = vunpack.c.l.b16 %v1843
          %v2106 = vunpack.c.h.b16 %v1843
          %v2107 = vunpack.c.l.b16 %v1844
          %v2108 = vunpack.c.l.b16 %v1845
          %v2109 = vunpack.c.h.b16 %v1845
          %v2110 = vunpack.c.l.b16 %v1846
          %v2111 = vunpack.c.l.b16 %v1847
          %v2112 = vunpack.c.h.b16 %v1847
          %v2113 = vunpack.c.l.b16 %v1848
          %v2114 = vunpack.c.l.b16 %v1849
          %v2115 = vunpack.c.h.b16 %v1849
          %v2116 = vunpack.c.l.b16 %v1850
          %v2117 = vunpack.c.l.b16 %v1851
          %v2118 = vunpack.c.h.b16 %v1851
          %v2119 = vunpack.c.l.b16 %v1852
          %v2120 = vunpack.c.l.b16 %v1853
          %v2121 = vunpack.c.h.b16 %v1853
          %v2122 = vunpack.c.l.b16 %v1854
          %v2123 = vunpack.c.l.b16 %v1855
          %v2124 = vunpack.c.h.b16 %v1855
          %v2125 = vunpack.c.l.b16 %v1856
          %v2126 = vunpack.c.l.b16 %v1857
          %v2127 = vunpack.c.h.b16 %v1857
          %v2128 = vunpack.c.l.b16 %v1858
          %v2129 = vunpack.c.l.b16 %v1859
          %v2130 = vunpack.c.h.b16 %v1859
          %v2131 = vunpack.c.l.b16 %v1860
          %v2132 = vunpack.c.l.b16 %v1861
          %v2133 = vunpack.c.h.b16 %v1861
          %v2134 = vunpack.c.l.b16 %v1862
          %v2135 = vunpack.c.l.b16 %v1863
          %v2136 = vunpack.c.h.b16 %v1863
          %v2137 = vunpack.c.l.b16 %v1864
          %v2138 = vunpack.c.l.b16 %v1865
          %v2139 = vunpack.c.h.b16 %v1865
          %v2140 = vunpack.c.l.b16 %v1866
          %v2141 = vunpack.c.l.b16 %v1867
          %v2142 = vunpack.c.h.b16 %v1867
          %v2143 = vunpack.c.l.b16 %v1868
          %v2144 = vunpack.c.l.b16 %v1869
          %v2145 = vunpack.c.h.b16 %v1869
          %v2146 = vunpack.c.l.b16 %v1870
          %v2147 = vunpack.c.l.b16 %v1871
          %v2148 = vunpack.c.h.b16 %v1871
          %v2149 = vunpack.c.l.b16 %v1872
          %v2150 = vunpack.c.l.b16 %v1873
          %v2151 = vunpack.c.h.b16 %v1873
          %v2152 = vunpack.c.l.b16 %v1874
          %v2153 = vunpack.c.l.b16 %v1875
          %v2154 = vunpack.c.h.b16 %v1875
          %v2155 = vunpack.c.l.b16 %v1876
          %v2156 = vunpack.c.l.b16 %v1877
          %v2157 = vunpack.c.h.b16 %v1877
          %v2158 = vunpack.c.l.b16 %v1878
          %v2159 = vunpack.c.l.b16 %v1879
          %v2160 = vunpack.c.h.b16 %v1879
          %v2161 = vunpack.c.l.b16 %v1880
          %v2162 = vunpack.c.l.b16 %v1881
          %v2163 = vunpack.c.h.b16 %v1881
          %v2164 = vunpack.c.l.b16 %v1882
          %v2165 = vunpack.c.l.b16 %v1883
          %v2166 = vunpack.c.h.b16 %v1883
          %v2167 = vunpack.c.l.b16 %v1884
          %v2168 = vunpack.c.l.b16 %v1885
          %v2169 = vunpack.c.h.b16 %v1885
          %v2170 = vunpack.c.l.b16 %v1886
          %v2171 = vunpack.c.l.b16 %v1887
          %v2172 = vunpack.c.h.b16 %v1887
          %v2173 = vunpack.c.l.b16 %v1888
          %v2174 = vunpack.c.l.b16 %v1889
          %v2175 = vunpack.c.h.b16 %v1889
          %v2176 = vunpack.c.l.b16 %v1890
          %v2177 = vunpack.c.l.b16 %v1891
          %v2178 = vunpack.c.h.b16 %v1891
          %v2179 = vunpack.c.l.b16 %v1892
          %v2180 = vunpack.c.l.b16 %v1893
          %v2181 = vunpack.c.h.b16 %v1893
          %v2182 = vunpack.c.l.b16 %v1894
          %v2183 = vpack.c.b16 %v2042, %v2039
          %v2184 = vpack.c.b16 %v2043, %v2040
          %v2185 = vpack.c.b16 %v2044, %v2041
          %v2186 = vpack.c.b16 %v2048, %v2045
          %v2187 = vpack.c.b16 %v2049, %v2046
          %v2188 = vpack.c.b16 %v2050, %v2047
          %v2189 = vpack.c.b16 %v2054, %v2051
          %v2190 = vpack.c.b16 %v2055, %v2052
          %v2191 = vpack.c.b16 %v2056, %v2053
          %v2192 = vpack.c.b16 %v2060, %v2057
          %v2193 = vpack.c.b16 %v2061, %v2058
          %v2194 = vpack.c.b16 %v2062, %v2059
          %v2195 = vpack.c.b16 %v2066, %v2063
          %v2196 = vpack.c.b16 %v2067, %v2064
          %v2197 = vpack.c.b16 %v2068, %v2065
          %v2198 = vpack.c.b16 %v2072, %v2069
          %v2199 = vpack.c.b16 %v2073, %v2070
          %v2200 = vpack.c.b16 %v2074, %v2071
          %v2201 = vpack.c.b16 %v2078, %v2075
          %v2202 = vpack.c.b16 %v2079, %v2076
          %v2203 = vpack.c.b16 %v2080, %v2077
          %v2204 = vpack.c.b16 %v2084, %v2081
          %v2205 = vpack.c.b16 %v2085, %v2082
          %v2206 = vpack.c.b16 %v2086, %v2083
          %v2207 = vpack.c.b16 %v2090, %v2087
          %v2208 = vpack.c.b16 %v2091, %v2088
          %v2209 = vpack.c.b16 %v2092, %v2089
          %v2210 = vpack.c.b16 %v2096, %v2093
          %v2211 = vpack.c.b16 %v2097, %v2094
          %v2212 = vpack.c.b16 %v2098, %v2095
          %v2213 = vpack.c.b16 %v2102, %v2099
          %v2214 = vpack.c.b16 %v2103, %v2100
          %v2215 = vpack.c.b16 %v2104, %v2101
          %v2216 = vpack.c.b16 %v2108, %v2105
          %v2217 = vpack.c.b16 %v2109, %v2106
          %v2218 = vpack.c.b16 %v2110, %v2107
          %v2219 = vpack.c.b16 %v2114, %v2111
          %v2220 = vpack.c.b16 %v2115, %v2112
          %v2221 = vpack.c.b16 %v2116, %v2113
          %v2222 = vpack.c.b16 %v2120, %v2117
          %v2223 = vpack.c.b16 %v2121, %v2118
          %v2224 = vpack.c.b16 %v2122, %v2119
          %v2225 = vpack.c.b16 %v2126, %v2123
          %v2226 = vpack.c.b16 %v2127, %v2124
          %v2227 = vpack.c.b16 %v2128, %v2125
          %v2228 = vpack.c.b16 %v2132, %v2129
          %v2229 = vpack.c.b16 %v2133, %v2130
          %v2230 = vpack.c.b16 %v2134, %v2131
          %v2231 = vpack.c.b16 %v2138, %v2135
          %v2232 = vpack.c.b16 %v2139, %v2136
          %v2233 = vpack.c.b16 %v2140, %v2137
          %v2234 = vpack.c.b16 %v2144, %v2141
          %v2235 = vpack.c.b16 %v2145, %v2142
          %v2236 = vpack.c.b16 %v2146, %v2143
          %v2237 = vpack.c.b16 %v2150, %v2147
          %v2238 = vpack.c.b16 %v2151, %v2148
          %v2239 = vpack.c.b16 %v2152, %v2149
          %v2240 = vpack.c.b16 %v2156, %v2153
          %v2241 = vpack.c.b16 %v2157, %v2154
          %v2242 = vpack.c.b16 %v2158, %v2155
          %v2243 = vpack.c.b16 %v2162, %v2159
          %v2244 = vpack.c.b16 %v2163, %v2160
          %v2245 = vpack.c.b16 %v2164, %v2161
          %v2246 = vpack.c.b16 %v2168, %v2165
          %v2247 = vpack.c.b16 %v2169, %v2166
          %v2248 = vpack.c.b16 %v2170, %v2167
          %v2249 = vpack.c.b16 %v2174, %v2171
          %v2250 = vpack.c.b16 %v2175, %v2172
          %v2251 = vpack.c.b16 %v2176, %v2173
          %v2252 = vpack.c.b16 %v2180, %v2177
          %v2253 = vpack.c.b16 %v2181, %v2178
          %v2254 = vpack.c.b16 %v2182, %v2179
          %v2375 = vunpack.c.l.b16 %v1895
          %v2376 = vunpack.c.l.b16 %v1896
          %v2377 = vunpack.c.l.b16 %v1897
          %v2378 = vunpack.c.l.b16 %v1898
          %v2379 = vunpack.c.l.b16 %v1899
          %v2380 = vunpack.c.l.b16 %v1900
          %v2381 = vunpack.c.l.b16 %v1901
          %v2382 = vunpack.c.l.b16 %v1902
          %v2383 = vunpack.c.l.b16 %v1903
          %v2384 = vunpack.c.l.b16 %v1904
          %v2385 = vunpack.c.l.b16 %v1905
          %v2386 = vunpack.c.l.b16 %v1906
          %v2387 = vunpack.c.l.b16 %v1907
          %v2388 = vunpack.c.l.b16 %v1908
          %v2389 = vunpack.c.l.b16 %v1909
          %v2390 = vunpack.c.l.b16 %v1910
          %v2391 = vunpack.c.l.b16 %v1911
          %v2392 = vunpack.c.l.b16 %v1912
          %v2393 = vunpack.c.l.b16 %v1913
          %v2394 = vunpack.c.l.b16 %v1914
          %v2395 = vunpack.c.l.b16 %v1915
          %v2396 = vunpack.c.l.b16 %v1916
          %v2397 = vunpack.c.l.b16 %v1917
          %v2398 = vunpack.c.l.b16 %v1918
          %v2399 = vunpack.c.l.b16 %v1919
          %v2400 = vunpack.c.l.b16 %v1920
          %v2401 = vunpack.c.l.b16 %v1921
          %v2402 = vunpack.c.l.b16 %v1922
          %v2403 = vunpack.c.l.b16 %v1923
          %v2404 = vunpack.c.l.b16 %v1924
          %v2405 = vunpack.c.l.b16 %v1925
          %v2406 = vunpack.c.l.b16 %v1926
          %v2407 = vunpack.c.l.b16 %v1927
          %v2408 = vunpack.c.l.b16 %v1928
          %v2409 = vunpack.c.l.b16 %v1929
          %v2410 = vunpack.c.l.b16 %v1930
          %v2411 = vunpack.c.l.b16 %v1931
          %v2412 = vunpack.c.l.b16 %v1932
          %v2413 = vunpack.c.l.b16 %v1933
          %v2414 = vunpack.c.l.b16 %v1934
          %v2415 = vunpack.c.l.b16 %v1935
          %v2416 = vunpack.c.l.b16 %v1936
          %v2417 = vunpack.c.l.b16 %v1937
          %v2418 = vunpack.c.l.b16 %v1938
          %v2419 = vunpack.c.l.b16 %v1939
          %v2420 = vunpack.c.l.b16 %v1940
          %v2421 = vunpack.c.l.b16 %v1941
          %v2422 = vunpack.c.l.b16 %v1942
          %v2423 = vpack.c.b16 %v2376, %v2375
          %v2424 = vpack.c.b16 %v2378, %v2377
          %v2425 = vpack.c.b16 %v2380, %v2379
          %v2426 = vpack.c.b16 %v2382, %v2381
          %v2427 = vpack.c.b16 %v2384, %v2383
          %v2428 = vpack.c.b16 %v2386, %v2385
          %v2429 = vpack.c.b16 %v2388, %v2387
          %v2430 = vpack.c.b16 %v2390, %v2389
          %v2431 = vpack.c.b16 %v2392, %v2391
          %v2432 = vpack.c.b16 %v2394, %v2393
          %v2433 = vpack.c.b16 %v2396, %v2395
          %v2434 = vpack.c.b16 %v2398, %v2397
          %v2435 = vpack.c.b16 %v2400, %v2399
          %v2436 = vpack.c.b16 %v2402, %v2401
          %v2437 = vpack.c.b16 %v2404, %v2403
          %v2438 = vpack.c.b16 %v2406, %v2405
          %v2439 = vpack.c.b16 %v2408, %v2407
          %v2440 = vpack.c.b16 %v2410, %v2409
          %v2441 = vpack.c.b16 %v2412, %v2411
          %v2442 = vpack.c.b16 %v2414, %v2413
          %v2443 = vpack.c.b16 %v2416, %v2415
          %v2444 = vpack.c.b16 %v2418, %v2417
          %v2445 = vpack.c.b16 %v2420, %v2419
          %v2446 = vpack.c.b16 %v2422, %v2421
          %2471 = vmatpush.bf16.msra.mxu0 %v2430
          %2472 = vmatpush.bf16.msra.mxu0 %v2429
          %2473 = vmatpush.bf16.msra.mxu0 %v2428
          %2474 = vmatpush.bf16.msra.mxu0 %v2427
          %2475 = vmatpush.bf16.msra.mxu0 %v2426
          %2476 = vmatpush.bf16.msra.mxu0 %v2425
          %2477 = vmatpush.bf16.msra.mxu0 %v2424
          %2478 = vmatpush.bf16.msra.mxu0 %v2423
          %2479 = vmatmul.bf16.gmra.mxu0 %v2183
          %v2480 = vpop.f32.mrf.mxu0
          %v2481 = vadd.f32 0.0, %v2480
          %v2482 = vpop.f32.mrf.mxu0
          %v2483 = vadd.f32 0.0, %v2482
          %2484 = vmatmul.bf16.gmra.mxu0 %v2186
          %v2485 = vpop.f32.mrf.mxu0
          %v2486 = vadd.f32 0.0, %v2485
          %v2487 = vpop.f32.mrf.mxu0
          %v2488 = vadd.f32 0.0, %v2487
          %2489 = vmatmul.bf16.gmra.mxu0 %v2189
          %v2490 = vpop.f32.mrf.mxu0
          %v2491 = vadd.f32 0.0, %v2490
          %v2492 = vpop.f32.mrf.mxu0
          %v2493 = vadd.f32 0.0, %v2492
          %2494 = vmatmul.bf16.gmra.mxu0 %v2192
          %v2495 = vpop.f32.mrf.mxu0
          %v2496 = vadd.f32 0.0, %v2495
          %v2497 = vpop.f32.mrf.mxu0
          %v2498 = vadd.f32 0.0, %v2497
          %2499 = vmatmul.bf16.gmra.mxu0 %v2195
          %v2500 = vpop.f32.mrf.mxu0
          %v2501 = vadd.f32 0.0, %v2500
          %v2502 = vpop.f32.mrf.mxu0
          %v2503 = vadd.f32 0.0, %v2502
          %2504 = vmatmul.bf16.gmra.mxu0 %v2198
          %v2505 = vpop.f32.mrf.mxu0
          %v2506 = vadd.f32 0.0, %v2505
          %v2507 = vpop.f32.mrf.mxu0
          %v2508 = vadd.f32 0.0, %v2507
          %2509 = vmatmul.bf16.gmra.mxu0 %v2201
          %v2510 = vpop.f32.mrf.mxu0
          %v2511 = vadd.f32 0.0, %v2510
          %v2512 = vpop.f32.mrf.mxu0
          %v2513 = vadd.f32 0.0, %v2512
          %2514 = vmatmul.bf16.gmra.mxu0 %v2204
          %v2515 = vpop.f32.mrf.mxu0
          %v2516 = vadd.f32 0.0, %v2515
          %v2517 = vpop.f32.mrf.mxu0
          %v2518 = vadd.f32 0.0, %v2517
          %2519 = vmatmul.bf16.gmra.mxu0 %v2207
          %v2520 = vpop.f32.mrf.mxu0
          %v2521 = vadd.f32 0.0, %v2520
          %v2522 = vpop.f32.mrf.mxu0
          %v2523 = vadd.f32 0.0, %v2522
          %2524 = vmatmul.bf16.gmra.mxu0 %v2210
          %v2525 = vpop.f32.mrf.mxu0
          %v2526 = vadd.f32 0.0, %v2525
          %v2527 = vpop.f32.mrf.mxu0
          %v2528 = vadd.f32 0.0, %v2527
          %2529 = vmatmul.bf16.gmra.mxu0 %v2213
          %v2530 = vpop.f32.mrf.mxu0
          %v2531 = vadd.f32 0.0, %v2530
          %v2532 = vpop.f32.mrf.mxu0
          %v2533 = vadd.f32 0.0, %v2532
          %2534 = vmatmul.bf16.gmra.mxu0 %v2216
          %v2535 = vpop.f32.mrf.mxu0
          %v2536 = vadd.f32 0.0, %v2535
          %v2537 = vpop.f32.mrf.mxu0
          %v2538 = vadd.f32 0.0, %v2537
          %2539 = vmatmul.bf16.gmra.mxu0 %v2219
          %v2540 = vpop.f32.mrf.mxu0
          %v2541 = vadd.f32 0.0, %v2540
          %v2542 = vpop.f32.mrf.mxu0
          %v2543 = vadd.f32 0.0, %v2542
          %2544 = vmatmul.bf16.gmra.mxu0 %v2222
          %v2545 = vpop.f32.mrf.mxu0
          %v2546 = vadd.f32 0.0, %v2545
          %v2547 = vpop.f32.mrf.mxu0
          %v2548 = vadd.f32 0.0, %v2547
          %2549 = vmatmul.bf16.gmra.mxu0 %v2225
          %v2550 = vpop.f32.mrf.mxu0
          %v2551 = vadd.f32 0.0, %v2550
          %v2552 = vpop.f32.mrf.mxu0
          %v2553 = vadd.f32 0.0, %v2552
          %2554 = vmatmul.bf16.gmra.mxu0 %v2228
          %v2555 = vpop.f32.mrf.mxu0
          %v2556 = vadd.f32 0.0, %v2555
          %v2557 = vpop.f32.mrf.mxu0
          %v2558 = vadd.f32 0.0, %v2557
          %2559 = vmatmul.bf16.gmra.mxu0 %v2231
          %v2560 = vpop.f32.mrf.mxu0
          %v2561 = vadd.f32 0.0, %v2560
          %v2562 = vpop.f32.mrf.mxu0
          %v2563 = vadd.f32 0.0, %v2562
          %2564 = vmatmul.bf16.gmra.mxu0 %v2234
          %v2565 = vpop.f32.mrf.mxu0
          %v2566 = vadd.f32 0.0, %v2565
          %v2567 = vpop.f32.mrf.mxu0
          %v2568 = vadd.f32 0.0, %v2567
          %2569 = vmatmul.bf16.gmra.mxu0 %v2237
          %v2570 = vpop.f32.mrf.mxu0
          %v2571 = vadd.f32 0.0, %v2570
          %v2572 = vpop.f32.mrf.mxu0
          %v2573 = vadd.f32 0.0, %v2572
          %2574 = vmatmul.bf16.gmra.mxu0 %v2240
          %v2575 = vpop.f32.mrf.mxu0
          %v2576 = vadd.f32 0.0, %v2575
          %v2577 = vpop.f32.mrf.mxu0
          %v2578 = vadd.f32 0.0, %v2577
          %2579 = vmatmul.bf16.gmra.mxu0 %v2243
          %v2580 = vpop.f32.mrf.mxu0
          %v2581 = vadd.f32 0.0, %v2580
          %v2582 = vpop.f32.mrf.mxu0
          %v2583 = vadd.f32 0.0, %v2582
          %2584 = vmatmul.bf16.gmra.mxu0 %v2246
          %v2585 = vpop.f32.mrf.mxu0
          %v2586 = vadd.f32 0.0, %v2585
          %v2587 = vpop.f32.mrf.mxu0
          %v2588 = vadd.f32 0.0, %v2587
          %2589 = vmatmul.bf16.gmra.mxu0 %v2249
          %v2590 = vpop.f32.mrf.mxu0
          %v2591 = vadd.f32 0.0, %v2590
          %v2592 = vpop.f32.mrf.mxu0
          %v2593 = vadd.f32 0.0, %v2592
          %2594 = vmatmul.bf16.gmra.mxu0 %v2252
          %v2595 = vpop.f32.mrf.mxu0
          %v2596 = vadd.f32 0.0, %v2595
          %v2597 = vpop.f32.mrf.mxu0
          %v2598 = vadd.f32 0.0, %v2597
          %2599 = vdwg.mxu0
          %2600 = vmatpush.bf16.msra.mxu0 %v2438
          %2601 = vmatpush.bf16.msra.mxu0 %v2437
          %2602 = vmatpush.bf16.msra.mxu0 %v2436
          %2603 = vmatpush.bf16.msra.mxu0 %v2435
          %2604 = vmatpush.bf16.msra.mxu0 %v2434
          %2605 = vmatpush.bf16.msra.mxu0 %v2433
          %2606 = vmatpush.bf16.msra.mxu0 %v2432
          %2607 = vmatpush.bf16.msra.mxu0 %v2431
          %2608 = vmatmul.bf16.gmra.mxu0 %v2184
          %v2609 = vpop.f32.mrf.mxu0
          %v2610 = vadd.f32 %v2481, %v2609
          %v2611 = vpop.f32.mrf.mxu0
          %v2612 = vadd.f32 %v2483, %v2611
          %2613 = vmatmul.bf16.gmra.mxu0 %v2187
          %v2614 = vpop.f32.mrf.mxu0
          %v2615 = vadd.f32 %v2486, %v2614
          %v2616 = vpop.f32.mrf.mxu0
          %v2617 = vadd.f32 %v2488, %v2616
          %2618 = vmatmul.bf16.gmra.mxu0 %v2190
          %v2619 = vpop.f32.mrf.mxu0
          %v2620 = vadd.f32 %v2491, %v2619
          %v2621 = vpop.f32.mrf.mxu0
          %v2622 = vadd.f32 %v2493, %v2621
          %2623 = vmatmul.bf16.gmra.mxu0 %v2193
          %v2624 = vpop.f32.mrf.mxu0
          %v2625 = vadd.f32 %v2496, %v2624
          %v2626 = vpop.f32.mrf.mxu0
          %v2627 = vadd.f32 %v2498, %v2626
          %2628 = vmatmul.bf16.gmra.mxu0 %v2196
          %v2629 = vpop.f32.mrf.mxu0
          %v2630 = vadd.f32 %v2501, %v2629
          %v2631 = vpop.f32.mrf.mxu0
          %v2632 = vadd.f32 %v2503, %v2631
          %2633 = vmatmul.bf16.gmra.mxu0 %v2199
          %v2634 = vpop.f32.mrf.mxu0
          %v2635 = vadd.f32 %v2506, %v2634
          %v2636 = vpop.f32.mrf.mxu0
          %v2637 = vadd.f32 %v2508, %v2636
          %2638 = vmatmul.bf16.gmra.mxu0 %v2202
          %v2639 = vpop.f32.mrf.mxu0
          %v2640 = vadd.f32 %v2511, %v2639
          %v2641 = vpop.f32.mrf.mxu0
          %v2642 = vadd.f32 %v2513, %v2641
          %2643 = vmatmul.bf16.gmra.mxu0 %v2205
          %v2644 = vpop.f32.mrf.mxu0
          %v2645 = vadd.f32 %v2516, %v2644
          %v2646 = vpop.f32.mrf.mxu0
          %v2647 = vadd.f32 %v2518, %v2646
          %2648 = vmatmul.bf16.gmra.mxu0 %v2208
          %v2649 = vpop.f32.mrf.mxu0
          %v2650 = vadd.f32 %v2521, %v2649
          %v2651 = vpop.f32.mrf.mxu0
          %v2652 = vadd.f32 %v2523, %v2651
          %2653 = vmatmul.bf16.gmra.mxu0 %v2211
          %v2654 = vpop.f32.mrf.mxu0
          %v2655 = vadd.f32 %v2526, %v2654
          %v2656 = vpop.f32.mrf.mxu0
          %v2657 = vadd.f32 %v2528, %v2656
          %2658 = vmatmul.bf16.gmra.mxu0 %v2214
          %v2659 = vpop.f32.mrf.mxu0
          %v2660 = vadd.f32 %v2531, %v2659
          %v2661 = vpop.f32.mrf.mxu0
          %v2662 = vadd.f32 %v2533, %v2661
          %2663 = vmatmul.bf16.gmra.mxu0 %v2217
          %v2664 = vpop.f32.mrf.mxu0
          %v2665 = vadd.f32 %v2536, %v2664
          %v2666 = vpop.f32.mrf.mxu0
          %v2667 = vadd.f32 %v2538, %v2666
          %2668 = vmatmul.bf16.gmra.mxu0 %v2220
          %v2669 = vpop.f32.mrf.mxu0
          %v2670 = vadd.f32 %v2541, %v2669
          %v2671 = vpop.f32.mrf.mxu0
          %v2672 = vadd.f32 %v2543, %v2671
          %2673 = vmatmul.bf16.gmra.mxu0 %v2223
          %v2674 = vpop.f32.mrf.mxu0
          %v2675 = vadd.f32 %v2546, %v2674
          %v2676 = vpop.f32.mrf.mxu0
          %v2677 = vadd.f32 %v2548, %v2676
          %2678 = vmatmul.bf16.gmra.mxu0 %v2226
          %v2679 = vpop.f32.mrf.mxu0
          %v2680 = vadd.f32 %v2551, %v2679
          %v2681 = vpop.f32.mrf.mxu0
          %v2682 = vadd.f32 %v2553, %v2681
          %2683 = vmatmul.bf16.gmra.mxu0 %v2229
          %v2684 = vpop.f32.mrf.mxu0
          %v2685 = vadd.f32 %v2556, %v2684
          %v2686 = vpop.f32.mrf.mxu0
          %v2687 = vadd.f32 %v2558, %v2686
          %2688 = vmatmul.bf16.gmra.mxu0 %v2232
          %v2689 = vpop.f32.mrf.mxu0
          %v2690 = vadd.f32 %v2561, %v2689
          %v2691 = vpop.f32.mrf.mxu0
          %v2692 = vadd.f32 %v2563, %v2691
          %2693 = vmatmul.bf16.gmra.mxu0 %v2235
          %v2694 = vpop.f32.mrf.mxu0
          %v2695 = vadd.f32 %v2566, %v2694
          %v2696 = vpop.f32.mrf.mxu0
          %v2697 = vadd.f32 %v2568, %v2696
          %2698 = vmatmul.bf16.gmra.mxu0 %v2238
          %v2699 = vpop.f32.mrf.mxu0
          %v2700 = vadd.f32 %v2571, %v2699
          %v2701 = vpop.f32.mrf.mxu0
          %v2702 = vadd.f32 %v2573, %v2701
          %2703 = vmatmul.bf16.gmra.mxu0 %v2241
          %v2704 = vpop.f32.mrf.mxu0
          %v2705 = vadd.f32 %v2576, %v2704
          %v2706 = vpop.f32.mrf.mxu0
          %v2707 = vadd.f32 %v2578, %v2706
          %2708 = vmatmul.bf16.gmra.mxu0 %v2244
          %v2709 = vpop.f32.mrf.mxu0
          %v2710 = vadd.f32 %v2581, %v2709
          %v2711 = vpop.f32.mrf.mxu0
          %v2712 = vadd.f32 %v2583, %v2711
          %2713 = vmatmul.bf16.gmra.mxu0 %v2247
          %v2714 = vpop.f32.mrf.mxu0
          %v2715 = vadd.f32 %v2586, %v2714
          %v2716 = vpop.f32.mrf.mxu0
          %v2717 = vadd.f32 %v2588, %v2716
          %2718 = vmatmul.bf16.gmra.mxu0 %v2250
          %v2719 = vpop.f32.mrf.mxu0
          %v2720 = vadd.f32 %v2591, %v2719
          %v2721 = vpop.f32.mrf.mxu0
          %v2722 = vadd.f32 %v2593, %v2721
          %2723 = vmatmul.bf16.gmra.mxu0 %v2253
          %v2724 = vpop.f32.mrf.mxu0
          %v2725 = vadd.f32 %v2596, %v2724
          %v2726 = vpop.f32.mrf.mxu0
          %v2727 = vadd.f32 %v2598, %v2726
          %2728 = vdwg.mxu0
          %2729 = vmatpush.bf16.msra.mxu0 %v2446
          %2730 = vmatpush.bf16.msra.mxu0 %v2445
          %2731 = vmatpush.bf16.msra.mxu0 %v2444
          %2732 = vmatpush.bf16.msra.mxu0 %v2443
          %2733 = vmatpush.bf16.msra.mxu0 %v2442
          %2734 = vmatpush.bf16.msra.mxu0 %v2441
          %2735 = vmatpush.bf16.msra.mxu0 %v2440
          %2736 = vmatpush.bf16.msra.mxu0 %v2439
          %2737 = vmatmul.bf16.gmra.mxu0 %v2185
          %v2738 = vpop.f32.mrf.mxu0
          %v2739 = vadd.f32 %v2610, %v2738
          %v2740 = vpop.f32.mrf.mxu0
          %v2741 = vadd.f32 %v2612, %v2740
          %2742 = vmatmul.bf16.gmra.mxu0 %v2188
          %v2743 = vpop.f32.mrf.mxu0
          %v2744 = vadd.f32 %v2615, %v2743
          %v2745 = vpop.f32.mrf.mxu0
          %v2746 = vadd.f32 %v2617, %v2745
          %2747 = vmatmul.bf16.gmra.mxu0 %v2191
          %v2748 = vpop.f32.mrf.mxu0
          %v2749 = vadd.f32 %v2620, %v2748
          %v2750 = vpop.f32.mrf.mxu0
          %v2751 = vadd.f32 %v2622, %v2750
          %2752 = vmatmul.bf16.gmra.mxu0 %v2194
          %v2753 = vpop.f32.mrf.mxu0
          %v2754 = vadd.f32 %v2625, %v2753
          %v2755 = vpop.f32.mrf.mxu0
          %v2756 = vadd.f32 %v2627, %v2755
          %2757 = vmatmul.bf16.gmra.mxu0 %v2197
          %v2758 = vpop.f32.mrf.mxu0
          %v2759 = vadd.f32 %v2630, %v2758
          %v2760 = vpop.f32.mrf.mxu0
          %v2761 = vadd.f32 %v2632, %v2760
          %2762 = vmatmul.bf16.gmra.mxu0 %v2200
          %v2763 = vpop.f32.mrf.mxu0
          %v2764 = vadd.f32 %v2635, %v2763
          %v2765 = vpop.f32.mrf.mxu0
          %v2766 = vadd.f32 %v2637, %v2765
          %2767 = vmatmul.bf16.gmra.mxu0 %v2203
          %v2768 = vpop.f32.mrf.mxu0
          %v2769 = vadd.f32 %v2640, %v2768
          %v2770 = vpop.f32.mrf.mxu0
          %v2771 = vadd.f32 %v2642, %v2770
          %2772 = vmatmul.bf16.gmra.mxu0 %v2206
          %v2773 = vpop.f32.mrf.mxu0
          %v2774 = vadd.f32 %v2645, %v2773
          %v2775 = vpop.f32.mrf.mxu0
          %v2776 = vadd.f32 %v2647, %v2775
          %2777 = vmatmul.bf16.gmra.mxu0 %v2209
          %v2778 = vpop.f32.mrf.mxu0
          %v2779 = vadd.f32 %v2650, %v2778
          %v2780 = vpop.f32.mrf.mxu0
          %v2781 = vadd.f32 %v2652, %v2780
          %2782 = vmatmul.bf16.gmra.mxu0 %v2212
          %v2783 = vpop.f32.mrf.mxu0
          %v2784 = vadd.f32 %v2655, %v2783
          %v2785 = vpop.f32.mrf.mxu0
          %v2786 = vadd.f32 %v2657, %v2785
          %2787 = vmatmul.bf16.gmra.mxu0 %v2215
          %v2788 = vpop.f32.mrf.mxu0
          %v2789 = vadd.f32 %v2660, %v2788
          %v2790 = vpop.f32.mrf.mxu0
          %v2791 = vadd.f32 %v2662, %v2790
          %2792 = vmatmul.bf16.gmra.mxu0 %v2218
          %v2793 = vpop.f32.mrf.mxu0
          %v2794 = vadd.f32 %v2665, %v2793
          %v2795 = vpop.f32.mrf.mxu0
          %v2796 = vadd.f32 %v2667, %v2795
          %2797 = vmatmul.bf16.gmra.mxu0 %v2221
          %v2798 = vpop.f32.mrf.mxu0
          %v2799 = vadd.f32 %v2670, %v2798
          %v2800 = vpop.f32.mrf.mxu0
          %v2801 = vadd.f32 %v2672, %v2800
          %2802 = vmatmul.bf16.gmra.mxu0 %v2224
          %v2803 = vpop.f32.mrf.mxu0
          %v2804 = vadd.f32 %v2675, %v2803
          %v2805 = vpop.f32.mrf.mxu0
          %v2806 = vadd.f32 %v2677, %v2805
          %2807 = vmatmul.bf16.gmra.mxu0 %v2227
          %v2808 = vpop.f32.mrf.mxu0
          %v2809 = vadd.f32 %v2680, %v2808
          %v2810 = vpop.f32.mrf.mxu0
          %v2811 = vadd.f32 %v2682, %v2810
          %2812 = vmatmul.bf16.gmra.mxu0 %v2230
          %v2813 = vpop.f32.mrf.mxu0
          %v2814 = vadd.f32 %v2685, %v2813
          %v2815 = vpop.f32.mrf.mxu0
          %v2816 = vadd.f32 %v2687, %v2815
          %2817 = vmatmul.bf16.gmra.mxu0 %v2233
          %v2818 = vpop.f32.mrf.mxu0
          %v2819 = vadd.f32 %v2690, %v2818
          %v2820 = vpop.f32.mrf.mxu0
          %v2821 = vadd.f32 %v2692, %v2820
          %2822 = vmatmul.bf16.gmra.mxu0 %v2236
          %v2823 = vpop.f32.mrf.mxu0
          %v2824 = vadd.f32 %v2695, %v2823
          %v2825 = vpop.f32.mrf.mxu0
          %v2826 = vadd.f32 %v2697, %v2825
          %2827 = vmatmul.bf16.gmra.mxu0 %v2239
          %v2828 = vpop.f32.mrf.mxu0
          %v2829 = vadd.f32 %v2700, %v2828
          %v2830 = vpop.f32.mrf.mxu0
          %v2831 = vadd.f32 %v2702, %v2830
          %2832 = vmatmul.bf16.gmra.mxu0 %v2242
          %v2833 = vpop.f32.mrf.mxu0
          %v2834 = vadd.f32 %v2705, %v2833
          %v2835 = vpop.f32.mrf.mxu0
          %v2836 = vadd.f32 %v2707, %v2835
          %2837 = vmatmul.bf16.gmra.mxu0 %v2245
          %v2838 = vpop.f32.mrf.mxu0
          %v2839 = vadd.f32 %v2710, %v2838
          %v2840 = vpop.f32.mrf.mxu0
          %v2841 = vadd.f32 %v2712, %v2840
          %2842 = vmatmul.bf16.gmra.mxu0 %v2248
          %v2843 = vpop.f32.mrf.mxu0
          %v2844 = vadd.f32 %v2715, %v2843
          %v2845 = vpop.f32.mrf.mxu0
          %v2846 = vadd.f32 %v2717, %v2845
          %2847 = vmatmul.bf16.gmra.mxu0 %v2251
          %v2848 = vpop.f32.mrf.mxu0
          %v2849 = vadd.f32 %v2720, %v2848
          %v2850 = vpop.f32.mrf.mxu0
          %v2851 = vadd.f32 %v2722, %v2850
          %2852 = vmatmul.bf16.gmra.mxu0 %v2254
          %v2853 = vpop.f32.mrf.mxu0
          %v2854 = vadd.f32 %v2725, %v2853
          %v2855 = vpop.f32.mrf.mxu0
          %v2856 = vadd.f32 %v2727, %v2855
          %2857 = vdwg.mxu0
          %2858 = vst [vmem:[%s216] sm:$0xff] %v2739
          %2859 = vst [vmem:[%s216 + $0x8] sm:$0xff] %v2741
          %2860 = vst [vmem:[%s216 + $0x10] sm:$0xff] %v2744
          %2861 = vst [vmem:[%s216 + $0x18] sm:$0xff] %v2746
          %2862 = vst [vmem:[%s216 + $0x20] sm:$0xff] %v2749
          %2863 = vst [vmem:[%s216 + $0x28] sm:$0xff] %v2751
          %2864 = vst [vmem:[%s216 + $0x30] sm:$0xff] %v2754
          %2865 = vst [vmem:[%s216 + $0x38] sm:$0xff] %v2756
          %2866 = vst [vmem:[%s216 + $0x40] sm:$0xff] %v2759
          %2867 = vst [vmem:[%s216 + $0x48] sm:$0xff] %v2761
          %2868 = vst [vmem:[%s216 + $0x50] sm:$0xff] %v2764
          %2869 = vst [vmem:[%s216 + $0x58] sm:$0xff] %v2766
          %2870 = vst [vmem:[%s216 + $0x60] sm:$0xff] %v2769
          %2871 = vst [vmem:[%s216 + $0x68] sm:$0xff] %v2771
          %2872 = vst [vmem:[%s216 + $0x70] sm:$0xff] %v2774
          %2873 = vst [vmem:[%s216 + $0x78] sm:$0xff] %v2776
          %2874 = vst [vmem:[%s216 + $0x80] sm:$0xff] %v2779
          %2875 = vst [vmem:[%s216 + $0x88] sm:$0xff] %v2781
          %2876 = vst [vmem:[%s216 + $0x90] sm:$0xff] %v2784
          %2877 = vst [vmem:[%s216 + $0x98] sm:$0xff] %v2786
          %2878 = vst [vmem:[%s216 + $0xa0] sm:$0xff] %v2789
          %2879 = vst [vmem:[%s216 + $0xa8] sm:$0xff] %v2791
          %2880 = vst [vmem:[%s216 + $0xb0] sm:$0xff] %v2794
          %2881 = vst [vmem:[%s216 + $0xb8] sm:$0xff] %v2796
          %2882 = vst [vmem:[%s216 + $0xc0] sm:$0xff] %v2799
          %2883 = vst [vmem:[%s216 + $0xc8] sm:$0xff] %v2801
          %2884 = vst [vmem:[%s216 + $0xd0] sm:$0xff] %v2804
          %2885 = vst [vmem:[%s216 + $0xd8] sm:$0xff] %v2806
          %2886 = vst [vmem:[%s216 + $0xe0] sm:$0xff] %v2809
          %2887 = vst [vmem:[%s216 + $0xe8] sm:$0xff] %v2811
          %2888 = vst [vmem:[%s216 + $0xf0] sm:$0xff] %v2814
          %2889 = vst [vmem:[%s216 + $0xf8] sm:$0xff] %v2816
          %2890 = vst [vmem:[%s216 + $0x100] sm:$0xff] %v2819
          %2891 = vst [vmem:[%s216 + $0x108] sm:$0xff] %v2821
          %2892 = vst [vmem:[%s216 + $0x110] sm:$0xff] %v2824
          %2893 = vst [vmem:[%s216 + $0x118] sm:$0xff] %v2826
          %2894 = vst [vmem:[%s216 + $0x120] sm:$0xff] %v2829
          %2895 = vst [vmem:[%s216 + $0x128] sm:$0xff] %v2831
          %2896 = vst [vmem:[%s216 + $0x130] sm:$0xff] %v2834
          %2897 = vst [vmem:[%s216 + $0x138] sm:$0xff] %v2836
          %2898 = vst [vmem:[%s216 + $0x140] sm:$0xff] %v2839
          %2899 = vst [vmem:[%s216 + $0x148] sm:$0xff] %v2841
          %2900 = vst [vmem:[%s216 + $0x150] sm:$0xff] %v2844
          %2901 = vst [vmem:[%s216 + $0x158] sm:$0xff] %v2846
          %2902 = vst [vmem:[%s216 + $0x160] sm:$0xff] %v2849
          %2903 = vst [vmem:[%s216 + $0x168] sm:$0xff] %v2851
          %2904 = vst [vmem:[%s216 + $0x170] sm:$0xff] %v2854
          %2905 = vst [vmem:[%s216 + $0x178] sm:$0xff] %v2856
        $region48: #{_gcn_forward_jit.1} parent=35 // pred_fallthru
          _
        %s2906 = smul.u32 48, %s21
        %p2907 = scmp.lt.s32.totalorder %s2906, 47
        %s2908 = scalar_select %p2907, %s2906, 47
        %s2909 = smul.addr %s2908, 8
        %s2910 = scalar_lea.vmem %s4, %s2909
        // Predicated region
        $region49: #{_gcn_forward_jit.1} parent=35 // pred_check
          %p2911 = pneg %p135
        $region50: #{_gcn_forward_jit.1} parent=35 // pred_check_branch
          %2913 = sbr.rel (%p2911) target = $region52
        $region51: #{_gcn_forward_jit.1} parent=35 // pred_region
          %s2914 = smul.u32 48, %s21
        $region52: #{_gcn_forward_jit.1} parent=35 // pred_fallthru
          _
        // Predicated region
        $region53: #{_gcn_forward_jit.1} parent=35 // pred_check
          %p2915 = pneg %p135
        $region54: #{_gcn_forward_jit.1} parent=35 // pred_check_branch
          %2917 = sbr.rel (%p2915) target = $region56
        $region55: #{_gcn_forward_jit.1} parent=35 // pred_region
          %s2918 = smul.u32 48, %s21
          %p2919 = scmp.lt.s32.totalorder %s2918, 47
          %s2920 = scalar_select %p2919, %s2918, 47
          %s2921 = smul.addr %s2920, 8
          %s2922 = scalar_lea.vmem %s4, %s2921
        $region56: #{_gcn_forward_jit.1} parent=35 // pred_fallthru
          _
      $region36: #{_gcn_forward_jit.1} parent=5 // pred_fallthru
        _
      %p2923 = scmp.le.s32.totalorder 2, %s11
      // Predicated region
      $region57: #{_gcn_forward_jit.1} parent=5 // pred_check
        %p2924 = pneg %p2923
      $region58: #{_gcn_forward_jit.1} parent=5 // pred_check_branch
        %2926 = sbr.rel (%p2924) target = $region60
      $region59: #{_gcn_forward_jit.1} parent=5 // pred_region
        %s2927 = ssub.s32 %s11, 2
      $region60: #{_gcn_forward_jit.1} parent=5 // pred_fallthru
        _
    $region6: #{_gcn_forward_jit.1} parent=1 // loop_footer
      %s15 = sadd.s32 1, %s11
    $region7: #{_gcn_forward_jit.1} parent=1 // loop_footer_branch
      %10 = sbr.rel target = $region3
    $region8: #{_gcn_forward_jit.1} parent=1 // loop_exit
      _
    %2928 = vsyncpa [#allocation4], 1
    %s2929 = scalar_lea.sflag [#allocation4], 1
    %2930 = vsyncpa %s2929, 1

</llo_original>
